<compile_context>
chip_gen: v5e
topology: v5e:2x2
jax: 0.10.0
libtpu: 0.0.40
codegen_flags: <defaults>
</compile_context>

<pallas_src>
import functools

import jax
import jax.numpy as jnp
from jax.experimental import pallas as pl
from jax.experimental.pallas import tpu as pltpu


# ----------------------------------------------------------------------------
# Fused Pallas kernel: stage-1 conv + stage-2 conv + siamese merge, per pair.
# ----------------------------------------------------------------------------
def _siam_fused_kernel(xc_ref, w1_ref, b1_ref, w2_ref, b2_ref,
                       o1_ref, o2_ref, s1_scr, *, merge, Ho, Wo, F1, F2):
    """Refs (one grid step = one image pair, both siamese branches):

      xc_ref : (1, 8*M1, 9*C) bf16  phase-split im2col of both branches;
                                    row = ((p*2+q)*2 + branch)*M1 + a*Wo + b
      w1_ref : (9*C, F1) bf16       stage-1 weights (tap-packed K)
      b1_ref : (1, F1)   f32
      w2_ref : (9, F1, F2) bf16     stage-2 per-tap weights
      b2_ref : (1, F2)   f32
      o1_ref : (1, 4, M1, Cm1) f32  merged stage-1 features (phase layout)
      o2_ref : (1, M1, Cm2)    f32  merged stage-2 features (flat Ho*Wo)
      s1_scr : (8, Ho+1, Wo+8, F1) f32  stage-1 activations, phase-split,
                                    interior at [1:, 8:] (tile-aligned), zero
                                    conv-padding halo at row 0 / col 7.
    """
    M1 = Ho * Wo

    # Zero only the 1-wide halo ring that stage-2 reads (row 0 and col 7 of
    # every phase image).  The interior is fully rewritten below, so no
    # full-scratch memset and no cross-step state.
    s1_scr[:, 0:1, :, :] = jnp.zeros((8, 1, Wo + 8, F1), jnp.float32)
    s1_scr[:, :, 7:8, :] = jnp.zeros((8, Ho + 1, 1, F1), jnp.float32)

    # ---- stage 1: ONE MXU dot covers 2 branches x 4 output phases ----------
    xc = xc_ref[0]                                          # (8*M1, 9*C) bf16
    s1 = jnp.dot(xc, w1_ref[...], preferred_element_type=jnp.float32)
    s1 = jnp.maximum(s1 + b1_ref[...], 0.0)                 # (8*M1, F1) f32

    # keep the stage-1 activation VMEM-resident for stage 2 (aligned store)
    s1_scr[:, 1:, 8:, :] = s1.reshape(8, Ho, Wo, F1)

    # stream the merged stage-1 features straight to the output
    s1r = s1.reshape(4, 2, M1, F1)                          # (phase, branch, ..)
    if merge == "conc":
        o1_ref[0, :, :, :F1] = s1r[:, 0]
        o1_ref[0, :, :, F1:] = s1r[:, 1]
    else:  # 'sub'
        o1_ref[0] = s1r[:, 0] - s1r[:, 1]

    # ---- stage 2: 3x3 / stride 2 / pad 1 over the phase-split scratch ------
    # Tap (di, dj) of the stride-2 conv needs s1 rows 2*oh + di - 1, i.e. the
    # row-phase p = (di+1)%2 image at contiguous row offset r0 = (di+1)//2
    # (same construction for columns with a col offset of 7 + c0).  Every tap
    # is a contiguous slab read -- no strided access, no redundant positions.
    acc = jnp.zeros((2 * M1, F2), jnp.float32)
    for di in range(3):
        p, r0 = (di + 1) % 2, (di + 1) // 2
        for dj in range(3):
            q, c0 = (dj + 1) % 2, (dj + 1) // 2
            t0 = (p * 2 + q) * 2
            slab = s1_scr[t0:t0 + 2, r0:r0 + Ho, 7 + c0:7 + c0 + Wo, :]
            slab = slab.reshape(2 * M1, F1).astype(jnp.bfloat16)
            acc = acc + jnp.dot(slab, w2_ref[di * 3 + dj],
                                preferred_element_type=jnp.float32)
    s2 = jnp.maximum(acc + b2_ref[...], 0.0)                # (2*M1, F2) f32

    if merge == "conc":
        o2_ref[0, :, :F2] = s2[:M1]
        o2_ref[0, :, F2:] = s2[M1:]
    else:
        o2_ref[0] = s2[:M1] - s2[M1:]


# ----------------------------------------------------------------------------
# Glue: relayout only (split_images, halo pad, phase-split im2col), done once
# in XLA outside the kernel.  All conv math stays inside the Pallas kernel.
# ----------------------------------------------------------------------------
def _phase_im2col(x_nchw, C):
    """(N, 2C, H, W) f32 -> (N, 8*Ho*Wo, 9*C) bf16 phase-split im2col.

    Row ordering ((p*2+q)*2 + branch)*Ho*Wo + a*Wo + b, column (di*3+dj)*C + c,
    value = x[branch][2a+p+di-1, 2b+q+dj-1, c] (zero outside the image).
    """
    N, _, H, W = x_nchw.shape
    xb = jnp.stack([x_nchw[:, :C], x_nchw[:, C:]], axis=1)        # (N,2,C,H,W)
    xb = jnp.transpose(xb, (0, 1, 3, 4, 2)).astype(jnp.bfloat16)  # (N,2,H,W,C)
    xp = jnp.pad(xb, ((0, 0), (0, 0), (1, 1), (1, 1), (0, 0)))    # spatial halo
    cols = []
    for p in range(2):
        for q in range(2):
            taps = [xp[:, :, p + di:p + di + H:2, q + dj:q + dj + W:2, :]
                    for di in range(3) for dj in range(3)]        # (N,2,Ho,Wo,C)
            cols.append(jnp.concatenate(taps, axis=-1))           # (N,2,Ho,Wo,9C)
    xcols = jnp.stack(cols, axis=1)                               # (N,4,2,Ho,Wo,9C)
    return xcols.reshape(N, 2 * H * W, 9 * C)                     # 8*Ho*Wo = 2*H*W


def init_params(c_in, f1=32, f2=64):
    """Deterministic synthetic 2-stage conv backbone weights."""
    k1, k2 = jax.random.split(jax.random.PRNGKey(42))
    w1 = jax.random.normal(k1, (3, 3, c_in, f1), jnp.float32) * 0.1
    b1 = jnp.linspace(-0.1, 0.1, f1, dtype=jnp.float32)
    w2 = jax.random.normal(k2, (3, 3, f1, f2), jnp.float32) * 0.05
    b2 = jnp.linspace(-0.1, 0.1, f2, dtype=jnp.float32)
    return dict(w1=w1, b1=b1, w2=w2, b2=b2)


# ----------------------------------------------------------------------------
# SiamBackboneWrapper forward
# ----------------------------------------------------------------------------
@functools.partial(jax.jit, static_argnames=("merge_method",))
def siam_backbone_forward(x_nchw, params, merge_method="conc"):
    """x_nchw: (N, 2*C, H, W) f32.  Returns [stage1, stage2] NCHW features."""
    N, C2, H, W = x_nchw.shape
    C = C2 // 2
    F1 = params["w1"].shape[-1]
    F2 = params["w2"].shape[-1]
    assert H % 2 == 0 and W % 2 == 0
    Ho, Wo = H // 2, W // 2
    M1 = Ho * Wo
    K1 = 9 * C

    mm = merge_method.lower()
    if mm in ("conc", "concatenate"):
        merge = "conc"
    elif mm in ("sub", "subtraction"):
        merge = "sub"
    else:
        raise ValueError(f"unknown merge_method {merge_method!r}")

    Cm1 = 2 * F1 if merge == "conc" else F1
    Cm2 = 2 * F2 if merge == "conc" else F2

    xcols = _phase_im2col(x_nchw, C)                              # bf16
    w1p = params["w1"].reshape(K1, F1).astype(jnp.bfloat16)
    b1p = params["b1"].reshape(1, F1).astype(jnp.float32)
    w2p = params["w2"].reshape(9, F1, F2).astype(jnp.bfloat16)
    b2p = params["b2"].reshape(1, F2).astype(jnp.float32)

    kernel = functools.partial(_siam_fused_kernel, merge=merge,
                               Ho=Ho, Wo=Wo, F1=F1, F2=F2)
    o1, o2 = pl.pallas_call(
        kernel,
        out_shape=(
            jax.ShapeDtypeStruct((N, 4, M1, Cm1), jnp.float32),
            jax.ShapeDtypeStruct((N, M1, Cm2), jnp.float32),
        ),
        grid_spec=pltpu.PrefetchScalarGridSpec(
            num_scalar_prefetch=0,
            grid=(N,),  # one image pair per step; N>=2 keeps both v7x TCs busy
            in_specs=[
                pl.BlockSpec((1, 8 * M1, K1), lambda i: (i, 0, 0)),
                pl.BlockSpec((K1, F1), lambda i: (0, 0)),
                pl.BlockSpec((1, F1), lambda i: (0, 0)),
                pl.BlockSpec((9, F1, F2), lambda i: (0, 0, 0)),
                pl.BlockSpec((1, F2), lambda i: (0, 0)),
            ],
            out_specs=[
                pl.BlockSpec((1, 4, M1, Cm1), lambda i: (i, 0, 0, 0)),
                pl.BlockSpec((1, M1, Cm2), lambda i: (i, 0, 0)),
            ],
            scratch_shapes=[
                pltpu.VMEM((8, Ho + 1, Wo + 8, F1), jnp.float32)],
        ),
        compiler_params=pltpu.CompilerParams(
            dimension_semantics=("parallel",)),
    )(xcols, w1p, b1p, w2p, b2p)

    # undo the phase layout (cheap XLA relayout), back to NCHW
    s1m = o1.reshape(N, 2, 2, Ho, Wo, Cm1)
    s1m = jnp.transpose(s1m, (0, 3, 1, 4, 2, 5)).reshape(N, H, W, Cm1)
    s2m = o2.reshape(N, Ho, Wo, Cm2)
    return [jnp.transpose(s1m, (0, 3, 1, 2)), jnp.transpose(s2m, (0, 3, 1, 2))]


# ----------------------------------------------------------------------------
# Pure-JAX reference (f32 math on bf16-rounded operands, mirroring the kernel)
# ----------------------------------------------------------------------------
def _reference_forward(x_nchw, params, merge):
    N, C2, _, _ = x_nchw.shape
    C = C2 // 2
    rnd = lambda v: v.astype(jnp.bfloat16).astype(jnp.float32)
    x1 = jnp.transpose(x_nchw[:, :C], (0, 2, 3, 1))
    x2 = jnp.transpose(x_nchw[:, C:], (0, 2, 3, 1))
    xm = jnp.concatenate([x1, x2], axis=0)

    def conv(z, w, b, stride):
        y = jax.lax.conv_general_dilated(
            rnd(z), rnd(w), window_strides=(stride, stride),
            padding=((1, 1), (1, 1)),
            dimension_numbers=("NHWC", "HWIO", "NHWC"),
            precision=jax.lax.Precision.HIGHEST)
        return jnp.maximum(y + b, 0.0)

    s1 = conv(xm, params["w1"], params["b1"], 1)
    s2 = conv(s1, params["w2"], params["b2"], 2)

    outs = []
    for s in (s1, s2):
        a, b = s[:N], s[N:]
        m = jnp.concatenate([a, b], axis=-1) if merge == "conc" else a - b
        outs.append(jnp.transpose(m, (0, 3, 1, 2)))
    return outs


# ----------------------------------------------------------------------------
if __name__ == "__main__":
    # small shapes: batch=2, per-branch channels=4 (input has 2*4=8 channels),
    # spatial=16x16
    N, C, H, W = 2, 4, 16, 16
    F1, F2 = 32, 64
    x = jax.random.normal(jax.random.PRNGKey(0), (N, 2 * C, H, W), jnp.float32)
    params = init_params(C, f1=F1, f2=F2)

    expected = {
        "conc": [(N, 2 * F1, H, W), (N, 2 * F2, H // 2, W // 2)],
        "sub": [(N, F1, H, W), (N, F2, H // 2, W // 2)],
    }
    for mm in ("conc", "sub"):
        outs = jax.block_until_ready(
            siam_backbone_forward(x, params, merge_method=mm))
        refs = _reference_forward(x, params, mm)
        for got, ref, shp in zip(outs, refs, expected[mm]):
            assert got.shape == shp, (mm, got.shape, shp)
            err = float(jnp.max(jnp.abs(got - ref)))
            assert err < 5e-2, f"merge={mm}: max abs err {err}"

    print("KERNEL_OK")
</pallas_src>

<mosaic_0001>
module attributes {stable_mosaic.version = 11 : i64} {
  func.func @_siam_fused_kernel(%arg0: i32, %arg1: memref<1x512x36xbf16, #tpu.memory_space<vmem>>, %arg2: memref<36x32xbf16, #tpu.memory_space<vmem>>, %arg3: memref<1x32xf32, #tpu.memory_space<vmem>>, %arg4: memref<9x32x64xbf16, #tpu.memory_space<vmem>>, %arg5: memref<1x64xf32, #tpu.memory_space<vmem>>, %arg6: memref<1x4x64x64xf32, #tpu.memory_space<vmem>>, %arg7: memref<1x64x128xf32, #tpu.memory_space<vmem>>, %arg8: memref<8x9x16x32xf32, #tpu.memory_space<vmem>>) attributes {dimension_semantics = [#tpu.dimension_semantics<parallel>], iteration_bounds = array<i64: 2>, scalar_prefetch = 0 : i64, scratch_operands = 1 : i64, tpu.core_type = #tpu.core_type<tc>, window_params = [{transform_indices = @transform_0, window_bounds = array<i64: 1, 512, 36>}, {pipeline_mode = #tpu.pipeline_mode<synchronous>, transform_indices = @transform_1, window_bounds = array<i64: 36, 32>}, {pipeline_mode = #tpu.pipeline_mode<synchronous>, transform_indices = @transform_2, window_bounds = array<i64: 1, 32>}, {pipeline_mode = #tpu.pipeline_mode<synchronous>, transform_indices = @transform_3, window_bounds = array<i64: 9, 32, 64>}, {pipeline_mode = #tpu.pipeline_mode<synchronous>, transform_indices = @transform_4, window_bounds = array<i64: 1, 64>}, {transform_indices = @transform_5, window_bounds = array<i64: 1, 4, 64, 64>}, {transform_indices = @transform_6, window_bounds = array<i64: 1, 64, 128>}]} {
    %cst = arith.constant 0.000000e+00 : f32
    %0 = vector.broadcast %cst : f32 to vector<8x1x16x32xf32>
    %c0 = arith.constant 0 : index
    %c0_0 = arith.constant 0 : index
    %c0_1 = arith.constant 0 : index
    %c0_2 = arith.constant 0 : index
    %1 = vector.load %arg8[%c0, %c0_0, %c0_1, %c0_2] : memref<8x9x16x32xf32, #tpu.memory_space<vmem>>, vector<8x1x16x32xf32>
    tpu.vector_store %arg8[%c0, %c0_0, %c0_1, %c0_2], %0 {strides = array<i32>} : memref<8x9x16x32xf32, #tpu.memory_space<vmem>>, vector<8x1x16x32xf32>,
    %cst_3 = arith.constant 0.000000e+00 : f32
    %2 = vector.broadcast %cst_3 : f32 to vector<8x9x1x32xf32>
    %c0_4 = arith.constant 0 : index
    %c0_5 = arith.constant 0 : index
    %c7 = arith.constant 7 : index
    %c0_6 = arith.constant 0 : index
    %3 = vector.load %arg8[%c0_4, %c0_5, %c7, %c0_6] : memref<8x9x16x32xf32, #tpu.memory_space<vmem>>, vector<8x9x1x32xf32>
    tpu.vector_store %arg8[%c0_4, %c0_5, %c7, %c0_6], %2 {strides = array<i32>} : memref<8x9x16x32xf32, #tpu.memory_space<vmem>>, vector<8x9x1x32xf32>,
    %c0_7 = arith.constant 0 : index
    %c0_8 = arith.constant 0 : index
    %c0_9 = arith.constant 0 : index
    %4 = vector.load %arg1[%c0_7, %c0_8, %c0_9] : memref<1x512x36xbf16, #tpu.memory_space<vmem>>, vector<1x512x36xbf16>
    %5 = vector.shape_cast %4 : vector<1x512x36xbf16> to vector<512x36xbf16>
    %c0_10 = arith.constant 0 : index
    %c0_11 = arith.constant 0 : index
    %6 = vector.load %arg2[%c0_10, %c0_11] : memref<36x32xbf16, #tpu.memory_space<vmem>>, vector<36x32xbf16>
    %cst_12 = arith.constant dense<0.000000e+00> : vector<512x32xf32>
    %7 = tpu.matmul %5, %6, %cst_12 {dimension_numbers = #tpu.dot_dimension_numbers<[1], [0], [0], [1], [0, 0, 1, 1], [], []>} : vector<512x36xbf16>, vector<36x32xbf16>, vector<512x32xf32> -> vector<512x32xf32>
    %c0_13 = arith.constant 0 : index
    %c0_14 = arith.constant 0 : index
    %8 = vector.load %arg3[%c0_13, %c0_14] : memref<1x32xf32, #tpu.memory_space<vmem>>, vector<1x32xf32>
    %9 = vector.broadcast %8 : vector<1x32xf32> to vector<512x32xf32>
    %10 = arith.addf %7, %9 : vector<512x32xf32>
    %cst_15 = arith.constant 0.000000e+00 : f32
    %11 = vector.broadcast %cst_15 : f32 to vector<512x32xf32>
    %12 = arith.maximumf %10, %11 : vector<512x32xf32>
    %13 = vector.shape_cast %12 : vector<512x32xf32> to vector<8x8x8x32xf32>
    %c0_16 = arith.constant 0 : index
    %c1 = arith.constant 1 : index
    %c8 = arith.constant 8 : index
    %c0_17 = arith.constant 0 : index
    %14 = vector.load %arg8[%c0_16, %c1, %c8, %c0_17] : memref<8x9x16x32xf32, #tpu.memory_space<vmem>>, vector<8x8x8x32xf32>
    tpu.vector_store %arg8[%c0_16, %c1, %c8, %c0_17], %13 {strides = array<i32>} : memref<8x9x16x32xf32, #tpu.memory_space<vmem>>, vector<8x8x8x32xf32>,
    %15 = vector.shape_cast %12 : vector<512x32xf32> to vector<4x2x64x32xf32>
    %16 = vector.extract_strided_slice %15 {offsets = [0, 0, 0, 0], sizes = [4, 1, 64, 32], strides = [1, 1, 1, 1]} : vector<4x2x64x32xf32> to vector<4x1x64x32xf32>
    %17 = vector.shape_cast %16 : vector<4x1x64x32xf32> to vector<4x64x32xf32>
    %c0_18 = arith.constant 0 : index
    %c0_19 = arith.constant 0 : index
    %c0_20 = arith.constant 0 : index
    %c0_21 = arith.constant 0 : index
    %18 = vector.load %arg6[%c0_18, %c0_19, %c0_20, %c0_21] : memref<1x4x64x64xf32, #tpu.memory_space<vmem>>, vector<1x4x64x32xf32>
    %19 = vector.shape_cast %18 : vector<1x4x64x32xf32> to vector<4x64x32xf32>
    %20 = vector.shape_cast %17 : vector<4x64x32xf32> to vector<1x4x64x32xf32>
    tpu.vector_store %arg6[%c0_18, %c0_19, %c0_20, %c0_21], %20 {strides = array<i32>} : memref<1x4x64x64xf32, #tpu.memory_space<vmem>>, vector<1x4x64x32xf32>,
    %21 = vector.extract_strided_slice %15 {offsets = [0, 1, 0, 0], sizes = [4, 1, 64, 32], strides = [1, 1, 1, 1]} : vector<4x2x64x32xf32> to vector<4x1x64x32xf32>
    %22 = vector.shape_cast %21 : vector<4x1x64x32xf32> to vector<4x64x32xf32>
    %c0_22 = arith.constant 0 : index
    %c0_23 = arith.constant 0 : index
    %c0_24 = arith.constant 0 : index
    %c32 = arith.constant 32 : index
    %23 = vector.load %arg6[%c0_22, %c0_23, %c0_24, %c32] : memref<1x4x64x64xf32, #tpu.memory_space<vmem>>, vector<1x4x64x32xf32>
    %24 = vector.shape_cast %23 : vector<1x4x64x32xf32> to vector<4x64x32xf32>
    %25 = vector.shape_cast %22 : vector<4x64x32xf32> to vector<1x4x64x32xf32>
    tpu.vector_store %arg6[%c0_22, %c0_23, %c0_24, %c32], %25 {strides = array<i32>} : memref<1x4x64x64xf32, #tpu.memory_space<vmem>>, vector<1x4x64x32xf32>,
    %cst_25 = arith.constant 0.000000e+00 : f32
    %26 = vector.broadcast %cst_25 : f32 to vector<128x64xf32>
    %c6 = arith.constant 6 : index
    %c0_26 = arith.constant 0 : index
    %c7_27 = arith.constant 7 : index
    %c0_28 = arith.constant 0 : index
    %27 = vector.load %arg8[%c6, %c0_26, %c7_27, %c0_28] : memref<8x9x16x32xf32, #tpu.memory_space<vmem>>, vector<2x8x8x32xf32>
    %28 = vector.shape_cast %27 : vector<2x8x8x32xf32> to vector<128x32xf32>
    %29 = arith.truncf %28 : vector<128x32xf32> to vector<128x32xbf16>
    %c0_29 = arith.constant 0 : index
    %c0_30 = arith.constant 0 : index
    %c0_31 = arith.constant 0 : index
    %30 = vector.load %arg4[%c0_29, %c0_30, %c0_31] : memref<9x32x64xbf16, #tpu.memory_space<vmem>>, vector<1x32x64xbf16>
    %31 = vector.shape_cast %30 : vector<1x32x64xbf16> to vector<32x64xbf16>
    %cst_32 = arith.constant dense<0.000000e+00> : vector<128x64xf32>
    %32 = tpu.matmul %29, %31, %cst_32 {dimension_numbers = #tpu.dot_dimension_numbers<[1], [0], [0], [1], [0, 0, 1, 1], [], []>} : vector<128x32xbf16>, vector<32x64xbf16>, vector<128x64xf32> -> vector<128x64xf32>
    %33 = arith.addf %26, %32 : vector<128x64xf32>
    %c4 = arith.constant 4 : index
    %c0_33 = arith.constant 0 : index
    %c8_34 = arith.constant 8 : index
    %c0_35 = arith.constant 0 : index
    %34 = vector.load %arg8[%c4, %c0_33, %c8_34, %c0_35] : memref<8x9x16x32xf32, #tpu.memory_space<vmem>>, vector<2x8x8x32xf32>
    %35 = vector.shape_cast %34 : vector<2x8x8x32xf32> to vector<128x32xf32>
    %36 = arith.truncf %35 : vector<128x32xf32> to vector<128x32xbf16>
    %c1_36 = arith.constant 1 : index
    %c0_37 = arith.constant 0 : index
    %c0_38 = arith.constant 0 : index
    %37 = vector.load %arg4[%c1_36, %c0_37, %c0_38] : memref<9x32x64xbf16, #tpu.memory_space<vmem>>, vector<1x32x64xbf16>
    %38 = vector.shape_cast %37 : vector<1x32x64xbf16> to vector<32x64xbf16>
    %cst_39 = arith.constant dense<0.000000e+00> : vector<128x64xf32>
    %39 = tpu.matmul %36, %38, %cst_39 {dimension_numbers = #tpu.dot_dimension_numbers<[1], [0], [0], [1], [0, 0, 1, 1], [], []>} : vector<128x32xbf16>, vector<32x64xbf16>, vector<128x64xf32> -> vector<128x64xf32>
    %40 = arith.addf %33, %39 : vector<128x64xf32>
    %c6_40 = arith.constant 6 : index
    %c0_41 = arith.constant 0 : index
    %c8_42 = arith.constant 8 : index
    %c0_43 = arith.constant 0 : index
    %41 = vector.load %arg8[%c6_40, %c0_41, %c8_42, %c0_43] : memref<8x9x16x32xf32, #tpu.memory_space<vmem>>, vector<2x8x8x32xf32>
    %42 = vector.shape_cast %41 : vector<2x8x8x32xf32> to vector<128x32xf32>
    %43 = arith.truncf %42 : vector<128x32xf32> to vector<128x32xbf16>
    %c2 = arith.constant 2 : index
    %c0_44 = arith.constant 0 : index
    %c0_45 = arith.constant 0 : index
    %44 = vector.load %arg4[%c2, %c0_44, %c0_45] : memref<9x32x64xbf16, #tpu.memory_space<vmem>>, vector<1x32x64xbf16>
    %45 = vector.shape_cast %44 : vector<1x32x64xbf16> to vector<32x64xbf16>
    %cst_46 = arith.constant dense<0.000000e+00> : vector<128x64xf32>
    %46 = tpu.matmul %43, %45, %cst_46 {dimension_numbers = #tpu.dot_dimension_numbers<[1], [0], [0], [1], [0, 0, 1, 1], [], []>} : vector<128x32xbf16>, vector<32x64xbf16>, vector<128x64xf32> -> vector<128x64xf32>
    %47 = arith.addf %40, %46 : vector<128x64xf32>
    %c2_47 = arith.constant 2 : index
    %c1_48 = arith.constant 1 : index
    %c7_49 = arith.constant 7 : index
    %c0_50 = arith.constant 0 : index
    %48 = vector.load %arg8[%c2_47, %c1_48, %c7_49, %c0_50] : memref<8x9x16x32xf32, #tpu.memory_space<vmem>>, vector<2x8x8x32xf32>
    %49 = vector.shape_cast %48 : vector<2x8x8x32xf32> to vector<128x32xf32>
    %50 = arith.truncf %49 : vector<128x32xf32> to vector<128x32xbf16>
    %c3 = arith.constant 3 : index
    %c0_51 = arith.constant 0 : index
    %c0_52 = arith.constant 0 : index
    %51 = vector.load %arg4[%c3, %c0_51, %c0_52] : memref<9x32x64xbf16, #tpu.memory_space<vmem>>, vector<1x32x64xbf16>
    %52 = vector.shape_cast %51 : vector<1x32x64xbf16> to vector<32x64xbf16>
    %cst_53 = arith.constant dense<0.000000e+00> : vector<128x64xf32>
    %53 = tpu.matmul %50, %52, %cst_53 {dimension_numbers = #tpu.dot_dimension_numbers<[1], [0], [0], [1], [0, 0, 1, 1], [], []>} : vector<128x32xbf16>, vector<32x64xbf16>, vector<128x64xf32> -> vector<128x64xf32>
    %54 = arith.addf %47, %53 : vector<128x64xf32>
    %c0_54 = arith.constant 0 : index
    %c1_55 = arith.constant 1 : index
    %c8_56 = arith.constant 8 : index
    %c0_57 = arith.constant 0 : index
    %55 = vector.load %arg8[%c0_54, %c1_55, %c8_56, %c0_57] : memref<8x9x16x32xf32, #tpu.memory_space<vmem>>, vector<2x8x8x32xf32>
    %56 = vector.shape_cast %55 : vector<2x8x8x32xf32> to vector<128x32xf32>
    %57 = arith.truncf %56 : vector<128x32xf32> to vector<128x32xbf16>
    %c4_58 = arith.constant 4 : index
    %c0_59 = arith.constant 0 : index
    %c0_60 = arith.constant 0 : index
    %58 = vector.load %arg4[%c4_58, %c0_59, %c0_60] : memref<9x32x64xbf16, #tpu.memory_space<vmem>>, vector<1x32x64xbf16>
    %59 = vector.shape_cast %58 : vector<1x32x64xbf16> to vector<32x64xbf16>
    %cst_61 = arith.constant dense<0.000000e+00> : vector<128x64xf32>
    %60 = tpu.matmul %57, %59, %cst_61 {dimension_numbers = #tpu.dot_dimension_numbers<[1], [0], [0], [1], [0, 0, 1, 1], [], []>} : vector<128x32xbf16>, vector<32x64xbf16>, vector<128x64xf32> -> vector<128x64xf32>
    %61 = arith.addf %54, %60 : vector<128x64xf32>
    %c2_62 = arith.constant 2 : index
    %c1_63 = arith.constant 1 : index
    %c8_64 = arith.constant 8 : index
    %c0_65 = arith.constant 0 : index
    %62 = vector.load %arg8[%c2_62, %c1_63, %c8_64, %c0_65] : memref<8x9x16x32xf32, #tpu.memory_space<vmem>>, vector<2x8x8x32xf32>
    %63 = vector.shape_cast %62 : vector<2x8x8x32xf32> to vector<128x32xf32>
    %64 = arith.truncf %63 : vector<128x32xf32> to vector<128x32xbf16>
    %c5 = arith.constant 5 : index
    %c0_66 = arith.constant 0 : index
    %c0_67 = arith.constant 0 : index
    %65 = vector.load %arg4[%c5, %c0_66, %c0_67] : memref<9x32x64xbf16, #tpu.memory_space<vmem>>, vector<1x32x64xbf16>
    %66 = vector.shape_cast %65 : vector<1x32x64xbf16> to vector<32x64xbf16>
    %cst_68 = arith.constant dense<0.000000e+00> : vector<128x64xf32>
    %67 = tpu.matmul %64, %66, %cst_68 {dimension_numbers = #tpu.dot_dimension_numbers<[1], [0], [0], [1], [0, 0, 1, 1], [], []>} : vector<128x32xbf16>, vector<32x64xbf16>, vector<128x64xf32> -> vector<128x64xf32>
    %68 = arith.addf %61, %67 : vector<128x64xf32>
    %c6_69 = arith.constant 6 : index
    %c1_70 = arith.constant 1 : index
    %c7_71 = arith.constant 7 : index
    %c0_72 = arith.constant 0 : index
    %69 = vector.load %arg8[%c6_69, %c1_70, %c7_71, %c0_72] : memref<8x9x16x32xf32, #tpu.memory_space<vmem>>, vector<2x8x8x32xf32>
    %70 = vector.shape_cast %69 : vector<2x8x8x32xf32> to vector<128x32xf32>
    %71 = arith.truncf %70 : vector<128x32xf32> to vector<128x32xbf16>
    %c6_73 = arith.constant 6 : index
    %c0_74 = arith.constant 0 : index
    %c0_75 = arith.constant 0 : index
    %72 = vector.load %arg4[%c6_73, %c0_74, %c0_75] : memref<9x32x64xbf16, #tpu.memory_space<vmem>>, vector<1x32x64xbf16>
    %73 = vector.shape_cast %72 : vector<1x32x64xbf16> to vector<32x64xbf16>
    %cst_76 = arith.constant dense<0.000000e+00> : vector<128x64xf32>
    %74 = tpu.matmul %71, %73, %cst_76 {dimension_numbers = #tpu.dot_dimension_numbers<[1], [0], [0], [1], [0, 0, 1, 1], [], []>} : vector<128x32xbf16>, vector<32x64xbf16>, vector<128x64xf32> -> vector<128x64xf32>
    %75 = arith.addf %68, %74 : vector<128x64xf32>
    %c4_77 = arith.constant 4 : index
    %c1_78 = arith.constant 1 : index
    %c8_79 = arith.constant 8 : index
    %c0_80 = arith.constant 0 : index
    %76 = vector.load %arg8[%c4_77, %c1_78, %c8_79, %c0_80] : memref<8x9x16x32xf32, #tpu.memory_space<vmem>>, vector<2x8x8x32xf32>
    %77 = vector.shape_cast %76 : vector<2x8x8x32xf32> to vector<128x32xf32>
    %78 = arith.truncf %77 : vector<128x32xf32> to vector<128x32xbf16>
    %c7_81 = arith.constant 7 : index
    %c0_82 = arith.constant 0 : index
    %c0_83 = arith.constant 0 : index
    %79 = vector.load %arg4[%c7_81, %c0_82, %c0_83] : memref<9x32x64xbf16, #tpu.memory_space<vmem>>, vector<1x32x64xbf16>
    %80 = vector.shape_cast %79 : vector<1x32x64xbf16> to vector<32x64xbf16>
    %cst_84 = arith.constant dense<0.000000e+00> : vector<128x64xf32>
    %81 = tpu.matmul %78, %80, %cst_84 {dimension_numbers = #tpu.dot_dimension_numbers<[1], [0], [0], [1], [0, 0, 1, 1], [], []>} : vector<128x32xbf16>, vector<32x64xbf16>, vector<128x64xf32> -> vector<128x64xf32>
    %82 = arith.addf %75, %81 : vector<128x64xf32>
    %c6_85 = arith.constant 6 : index
    %c1_86 = arith.constant 1 : index
    %c8_87 = arith.constant 8 : index
    %c0_88 = arith.constant 0 : index
    %83 = vector.load %arg8[%c6_85, %c1_86, %c8_87, %c0_88] : memref<8x9x16x32xf32, #tpu.memory_space<vmem>>, vector<2x8x8x32xf32>
    %84 = vector.shape_cast %83 : vector<2x8x8x32xf32> to vector<128x32xf32>
    %85 = arith.truncf %84 : vector<128x32xf32> to vector<128x32xbf16>
    %c8_89 = arith.constant 8 : index
    %c0_90 = arith.constant 0 : index
    %c0_91 = arith.constant 0 : index
    %86 = vector.load %arg4[%c8_89, %c0_90, %c0_91] : memref<9x32x64xbf16, #tpu.memory_space<vmem>>, vector<1x32x64xbf16>
    %87 = vector.shape_cast %86 : vector<1x32x64xbf16> to vector<32x64xbf16>
    %cst_92 = arith.constant dense<0.000000e+00> : vector<128x64xf32>
    %88 = tpu.matmul %85, %87, %cst_92 {dimension_numbers = #tpu.dot_dimension_numbers<[1], [0], [0], [1], [0, 0, 1, 1], [], []>} : vector<128x32xbf16>, vector<32x64xbf16>, vector<128x64xf32> -> vector<128x64xf32>
    %89 = arith.addf %82, %88 : vector<128x64xf32>
    %c0_93 = arith.constant 0 : index
    %c0_94 = arith.constant 0 : index
    %90 = vector.load %arg5[%c0_93, %c0_94] : memref<1x64xf32, #tpu.memory_space<vmem>>, vector<1x64xf32>
    %91 = vector.broadcast %90 : vector<1x64xf32> to vector<128x64xf32>
    %92 = arith.addf %89, %91 : vector<128x64xf32>
    %cst_95 = arith.constant 0.000000e+00 : f32
    %93 = vector.broadcast %cst_95 : f32 to vector<128x64xf32>
    %94 = arith.maximumf %92, %93 : vector<128x64xf32>
    %95 = vector.extract_strided_slice %94 {offsets = [0, 0], sizes = [64, 64], strides = [1, 1]} : vector<128x64xf32> to vector<64x64xf32>
    %c0_96 = arith.constant 0 : index
    %c0_97 = arith.constant 0 : index
    %c0_98 = arith.constant 0 : index
    %96 = vector.load %arg7[%c0_96, %c0_97, %c0_98] : memref<1x64x128xf32, #tpu.memory_space<vmem>>, vector<1x64x64xf32>
    %97 = vector.shape_cast %96 : vector<1x64x64xf32> to vector<64x64xf32>
    %98 = vector.shape_cast %95 : vector<64x64xf32> to vector<1x64x64xf32>
    tpu.vector_store %arg7[%c0_96, %c0_97, %c0_98], %98 {strides = array<i32>} : memref<1x64x128xf32, #tpu.memory_space<vmem>>, vector<1x64x64xf32>,
    %99 = vector.extract_strided_slice %94 {offsets = [64, 0], sizes = [64, 64], strides = [1, 1]} : vector<128x64xf32> to vector<64x64xf32>
    %c0_99 = arith.constant 0 : index
    %c0_100 = arith.constant 0 : index
    %c64 = arith.constant 64 : index
    %100 = vector.load %arg7[%c0_99, %c0_100, %c64] : memref<1x64x128xf32, #tpu.memory_space<vmem>>, vector<1x64x64xf32>
    %101 = vector.shape_cast %100 : vector<1x64x64xf32> to vector<64x64xf32>
    %102 = vector.shape_cast %99 : vector<64x64xf32> to vector<1x64x64xf32>
    tpu.vector_store %arg7[%c0_99, %c0_100, %c64], %102 {strides = array<i32>} : memref<1x64x128xf32, #tpu.memory_space<vmem>>, vector<1x64x64xf32>,
    return
  }
  func.func @transform_0(%arg0: i32) -> (i32, i32, i32) {
    %c0_i32 = arith.constant 0 : i32
    %c0_i32_0 = arith.constant 0 : i32
    %c0_i32_1 = arith.constant 0 : i32
    return %arg0, %c0_i32, %c0_i32_0 : i32, i32, i32
  }
  func.func @transform_1(%arg0: i32) -> (i32, i32) {
    %c0_i32 = arith.constant 0 : i32
    %c0_i32_0 = arith.constant 0 : i32
    %c0_i32_1 = arith.constant 0 : i32
    return %c0_i32, %c0_i32_0 : i32, i32
  }
  func.func @transform_2(%arg0: i32) -> (i32, i32) {
    %c0_i32 = arith.constant 0 : i32
    %c0_i32_0 = arith.constant 0 : i32
    %c0_i32_1 = arith.constant 0 : i32
    return %c0_i32, %c0_i32_0 : i32, i32
  }
  func.func @transform_3(%arg0: i32) -> (i32, i32, i32) {
    %c0_i32 = arith.constant 0 : i32
    %c0_i32_0 = arith.constant 0 : i32
    %c0_i32_1 = arith.constant 0 : i32
    %c0_i32_2 = arith.constant 0 : i32
    return %c0_i32, %c0_i32_0, %c0_i32_1 : i32, i32, i32
  }
  func.func @transform_4(%arg0: i32) -> (i32, i32) {
    %c0_i32 = arith.constant 0 : i32
    %c0_i32_0 = arith.constant 0 : i32
    %c0_i32_1 = arith.constant 0 : i32
    return %c0_i32, %c0_i32_0 : i32, i32
  }
  func.func @transform_5(%arg0: i32) -> (i32, i32, i32, i32) {
    %c0_i32 = arith.constant 0 : i32
    %c0_i32_0 = arith.constant 0 : i32
    %c0_i32_1 = arith.constant 0 : i32
    %c0_i32_2 = arith.constant 0 : i32
    return %arg0, %c0_i32, %c0_i32_0, %c0_i32_1 : i32, i32, i32, i32
  }
  func.func @transform_6(%arg0: i32) -> (i32, i32, i32) {
    %c0_i32 = arith.constant 0 : i32
    %c0_i32_0 = arith.constant 0 : i32
    %c0_i32_1 = arith.constant 0 : i32
    return %arg0, %c0_i32, %c0_i32_0 : i32, i32, i32
  }
}

</mosaic_0001>

<llo_original>
// kernel: siam_backbone_forward.1
$region0: #{siam_backbone_forward.1}
  #allocation0 [shape = 'u32[]', space=smem, size = 0x4, offset = 0x4, fixed_abs, tag = 'smem constant byte address 0x4 - core index']
  #allocation1 [shape = 'u32[72,128]{1,0:T(1,128)}', space=vmem, size = 0x9000, scoped, tag = 'internal scratch']
  #allocation2 [shape = 'f32[8,9,16,32]{3,2,1,0:T(8,128)}', space=vmem, size = 0x90000, scoped, tag = 'scratch operand']
  %s0 = inlined_call_operand.vmem [shape: bf16[2,512,36], index: 0, kind: input, shape index: {}]
  %s1 = inlined_call_operand.vmem [shape: bf16[36,32], index: 1, kind: input, shape index: {}]
  %s2 = inlined_call_operand.vmem [shape: f32[1,32], index: 2, kind: input, shape index: {}]
  %s3 = inlined_call_operand.vmem [shape: bf16[9,32,64], index: 3, kind: input, shape index: {}]
  %s4 = inlined_call_operand.vmem [shape: f32[1,64], index: 4, kind: input, shape index: {}]
  %s5 = inlined_call_operand.vmem [shape: f32[2,4,64,64], index: 5, kind: output, shape index: {0}]
  %s6 = inlined_call_operand.hbm [shape: f32[2,64,128], index: 6, kind: output, shape index: {1}]
  %7 = xla_tuple %s5, %s6
  %s8 = sld [smem:[#allocation0]]
  $region61: #{siam_backbone_forward.1} parent=0
    _
  %s10 = ssub.s32 1, %s8
  %s11 = scalar_select 0, %s10, %s8
  $region1: #{siam_backbone_forward.1} parent=0
    #allocation3 [shape = 'u8[65536]{0}', space=vmem, size = 0x10000, scoped, tag = 'output window, operand 1']
    #allocation4 [shape = 's32[2]{0}', space=sflag, size = 0x8, scoped, tag = 'scoped memory for siam_backbone_forward.1']
    %12 = vsyncpa [#allocation4], 0
    %s13 = scalar_lea.sflag [#allocation4], 1
    %14 = vsyncpa %s13, 0
    loop: start=0, step=1, limit=4
    $region2: #{siam_backbone_forward.1} parent=1 // loop_pre_header
      _
    $region3: #{siam_backbone_forward.1} parent=1 // loop_header
      %s16 = sphi 0, %s20
      %p17 = scmp.ge.s32.totalorder %s16, 4
      %s26 = sphi 0, %s28
      %s29 = sphi 0, %s26
      %s30 = sphi 0, %s29
      %s46 = sphi 0, %s30
      %s50 = sphi 0, %s50
      %s52 = sphi 0, %s50
      %s53 = sphi 0, %s52
      %s67 = sphi 0, %s53
      %s71 = sphi 0, %s71
      %s73 = sphi 0, %s71
      %s74 = sphi 0, %s73
      %s88 = sphi 0, %s74
      %s92 = sphi 0, %s92
      %s94 = sphi 0, %s92
      %s95 = sphi 0, %s94
      %s109 = sphi 0, %s95
      %s113 = sphi 0, %s113
      %s115 = sphi 0, %s113
      %s116 = sphi 0, %s115
      %s130 = sphi 0, %s116
      %s136 = sphi 0, %s138
      %s139 = sphi 0, %s136
      %s140 = sphi 0, %s139
      %s156 = sphi 0, %s140
      %s162 = sphi 0, %s164
      %s165 = sphi 0, %s162
      %s166 = sphi 0, %s165
      %s182 = sphi 0, %s166
    $region4: #{siam_backbone_forward.1} parent=1 // loop_header_branch
      %19 = sbr.rel (%p17) target = $region8
    $region5: #{siam_backbone_forward.1} parent=1 // loop_body
      %s21 = ssub.s32 %s16, 1
      %s22 = ssub.s32 %s16, 2
      %s23 = sadd.s32 %s16, 1
      %s24 = ssub.s32 %s16, %s23
      %p25 = scmp.eq.s32.totalorder %s24, 0
      %s27 = sadd.s32 %s26, 1
      %s28 = scalar_select %p25, %s26, %s27
      %p31 = pneg %p25
      %p32 = scmp.eq.s32.totalorder %s16, 1
      %p33 = por %p31, %p32
      %p34 = scmp.ne.s32.totalorder %s26, %s29
      %p35 = scmp.eq.s32.totalorder %s16, 0
      %p36 = por %p34, %p35
      %p37 = scmp.ne.s32.totalorder %s26, %s29
      %p38 = scmp.eq.s32.totalorder %s21, 1
      %p39 = por %p37, %p38
      %p40 = scmp.ne.s32.totalorder %s29, %s30
      %p41 = scmp.eq.s32.totalorder %s21, 0
      %p42 = por %p40, %p41
      %p43 = scmp.ne.s32.totalorder %s29, %s30
      %p44 = scmp.eq.s32.totalorder %s22, 1
      %p45 = por %p43, %p44
      %p47 = scmp.ne.s32.totalorder %s30, %s46
      %p48 = scmp.eq.s32.totalorder %s22, 0
      %p49 = por %p47, %p48
      %s51 = sadd.s32 %s50, 1
      %p54 = scmp.eq.s32.totalorder %s16, 1
      %p55 = scmp.ne.s32.totalorder %s50, %s52
      %p56 = scmp.eq.s32.totalorder %s16, 0
      %p57 = por %p55, %p56
      %p58 = scmp.ne.s32.totalorder %s50, %s52
      %p59 = scmp.eq.s32.totalorder %s21, 1
      %p60 = por %p58, %p59
      %p61 = scmp.ne.s32.totalorder %s52, %s53
      %p62 = scmp.eq.s32.totalorder %s21, 0
      %p63 = por %p61, %p62
      %p64 = scmp.ne.s32.totalorder %s52, %s53
      %p65 = scmp.eq.s32.totalorder %s22, 1
      %p66 = por %p64, %p65
      %p68 = scmp.ne.s32.totalorder %s53, %s67
      %p69 = scmp.eq.s32.totalorder %s22, 0
      %p70 = por %p68, %p69
      %s72 = sadd.s32 %s71, 1
      %p75 = scmp.eq.s32.totalorder %s16, 1
      %p76 = scmp.ne.s32.totalorder %s71, %s73
      %p77 = scmp.eq.s32.totalorder %s16, 0
      %p78 = por %p76, %p77
      %p79 = scmp.ne.s32.totalorder %s71, %s73
      %p80 = scmp.eq.s32.totalorder %s21, 1
      %p81 = por %p79, %p80
      %p82 = scmp.ne.s32.totalorder %s73, %s74
      %p83 = scmp.eq.s32.totalorder %s21, 0
      %p84 = por %p82, %p83
      %p85 = scmp.ne.s32.totalorder %s73, %s74
      %p86 = scmp.eq.s32.totalorder %s22, 1
      %p87 = por %p85, %p86
      %p89 = scmp.ne.s32.totalorder %s74, %s88
      %p90 = scmp.eq.s32.totalorder %s22, 0
      %p91 = por %p89, %p90
      %s93 = sadd.s32 %s92, 1
      %p96 = scmp.eq.s32.totalorder %s16, 1
      %p97 = scmp.ne.s32.totalorder %s92, %s94
      %p98 = scmp.eq.s32.totalorder %s16, 0
      %p99 = por %p97, %p98
      %p100 = scmp.ne.s32.totalorder %s92, %s94
      %p101 = scmp.eq.s32.totalorder %s21, 1
      %p102 = por %p100, %p101
      %p103 = scmp.ne.s32.totalorder %s94, %s95
      %p104 = scmp.eq.s32.totalorder %s21, 0
      %p105 = por %p103, %p104
      %p106 = scmp.ne.s32.totalorder %s94, %s95
      %p107 = scmp.eq.s32.totalorder %s22, 1
      %p108 = por %p106, %p107
      %p110 = scmp.ne.s32.totalorder %s95, %s109
      %p111 = scmp.eq.s32.totalorder %s22, 0
      %p112 = por %p110, %p111
      %s114 = sadd.s32 %s113, 1
      %p117 = scmp.eq.s32.totalorder %s16, 1
      %p118 = scmp.ne.s32.totalorder %s113, %s115
      %p119 = scmp.eq.s32.totalorder %s16, 0
      %p120 = por %p118, %p119
      %p121 = scmp.ne.s32.totalorder %s113, %s115
      %p122 = scmp.eq.s32.totalorder %s21, 1
      %p123 = por %p121, %p122
      %p124 = scmp.ne.s32.totalorder %s115, %s116
      %p125 = scmp.eq.s32.totalorder %s21, 0
      %p126 = por %p124, %p125
      %p127 = scmp.ne.s32.totalorder %s115, %s116
      %p128 = scmp.eq.s32.totalorder %s22, 1
      %p129 = por %p127, %p128
      %p131 = scmp.ne.s32.totalorder %s116, %s130
      %p132 = scmp.eq.s32.totalorder %s22, 0
      %p133 = por %p131, %p132
      %s134 = ssub.s32 %s16, %s23
      %p135 = scmp.eq.s32.totalorder %s134, 0
      %s137 = sadd.s32 %s136, 1
      %s138 = scalar_select %p135, %s136, %s137
      %p141 = pneg %p135
      %p142 = scmp.eq.s32.totalorder %s16, 1
      %p143 = por %p141, %p142
      %p144 = scmp.ne.s32.totalorder %s136, %s139
      %p145 = scmp.eq.s32.totalorder %s16, 0
      %p146 = por %p144, %p145
      %p147 = scmp.ne.s32.totalorder %s136, %s139
      %p148 = scmp.eq.s32.totalorder %s21, 1
      %p149 = por %p147, %p148
      %p150 = scmp.ne.s32.totalorder %s139, %s140
      %p151 = scmp.eq.s32.totalorder %s21, 0
      %p152 = por %p150, %p151
      %p153 = scmp.ne.s32.totalorder %s139, %s140
      %p154 = scmp.eq.s32.totalorder %s22, 1
      %p155 = por %p153, %p154
      %p157 = scmp.ne.s32.totalorder %s140, %s156
      %p158 = scmp.eq.s32.totalorder %s22, 0
      %p159 = por %p157, %p158
      %s160 = ssub.s32 %s16, %s23
      %p161 = scmp.eq.s32.totalorder %s160, 0
      %s163 = sadd.s32 %s162, 1
      %s164 = scalar_select %p161, %s162, %s163
      %p167 = pneg %p161
      %p168 = scmp.eq.s32.totalorder %s16, 1
      %p169 = por %p167, %p168
      %p170 = scmp.ne.s32.totalorder %s162, %s165
      %p171 = scmp.eq.s32.totalorder %s16, 0
      %p172 = por %p170, %p171
      %p173 = scmp.ne.s32.totalorder %s162, %s165
      %p174 = scmp.eq.s32.totalorder %s21, 1
      %p175 = por %p173, %p174
      %p176 = scmp.ne.s32.totalorder %s165, %s166
      %p177 = scmp.eq.s32.totalorder %s21, 0
      %p178 = por %p176, %p177
      %p179 = scmp.ne.s32.totalorder %s165, %s166
      %p180 = scmp.eq.s32.totalorder %s22, 1
      %p181 = por %p179, %p180
      %p183 = scmp.ne.s32.totalorder %s166, %s182
      %p184 = scmp.eq.s32.totalorder %s22, 0
      %p185 = por %p183, %p184
      %p186 = scmp.le.s32.totalorder 1, %s16
      %p187 = scmp.lt.s32.totalorder %s16, 3
      %p188 = pnand %p186, %p187
      %p189 = pneg %p188
      // Predicated region
      $region9: #{siam_backbone_forward.1} parent=5 // pred_check
        _
      $region10: #{siam_backbone_forward.1} parent=5 // pred_check_branch
        %191 = sbr.rel (%p188) target = $region12
      $region11: #{siam_backbone_forward.1} parent=5 // pred_region
        %s192 = ssub.s32 %s16, 1
        // Predicated region
        $region13: #{siam_backbone_forward.1} parent=11 // pred_check
          %p193 = pneg %p63
        $region14: #{siam_backbone_forward.1} parent=11 // pred_check_branch
          %195 = sbr.rel (%p193) target = $region16
        $region15: #{siam_backbone_forward.1} parent=11 // pred_region
          _
        $region16: #{siam_backbone_forward.1} parent=11 // pred_fallthru
          _
        // Predicated region
        $region17: #{siam_backbone_forward.1} parent=11 // pred_check
          %p196 = pneg %p84
        $region18: #{siam_backbone_forward.1} parent=11 // pred_check_branch
          %198 = sbr.rel (%p196) target = $region20
        $region19: #{siam_backbone_forward.1} parent=11 // pred_region
          _
        $region20: #{siam_backbone_forward.1} parent=11 // pred_fallthru
          _
        // Predicated region
        $region21: #{siam_backbone_forward.1} parent=11 // pred_check
          %p199 = pneg %p105
        $region22: #{siam_backbone_forward.1} parent=11 // pred_check_branch
          %201 = sbr.rel (%p199) target = $region24
        $region23: #{siam_backbone_forward.1} parent=11 // pred_region
          _
        $region24: #{siam_backbone_forward.1} parent=11 // pred_fallthru
          _
        // Predicated region
        $region25: #{siam_backbone_forward.1} parent=11 // pred_check
          %p202 = pneg %p126
        $region26: #{siam_backbone_forward.1} parent=11 // pred_check_branch
          %204 = sbr.rel (%p202) target = $region28
        $region27: #{siam_backbone_forward.1} parent=11 // pred_region
          _
        $region28: #{siam_backbone_forward.1} parent=11 // pred_fallthru
          _
      $region12: #{siam_backbone_forward.1} parent=5 // pred_fallthru
        _
      %p205 = scmp.lt.s32.totalorder %s16, 2
      // Predicated region
      $region29: #{siam_backbone_forward.1} parent=5 // pred_check
        %p206 = pneg %p205
      $region30: #{siam_backbone_forward.1} parent=5 // pred_check_branch
        %208 = sbr.rel (%p206) target = $region32
      $region31: #{siam_backbone_forward.1} parent=5 // pred_region
        // Predicated region
        $region33: #{siam_backbone_forward.1} parent=31 // pred_check
          %p209 = pneg %p36
        $region34: #{siam_backbone_forward.1} parent=31 // pred_check_branch
          %211 = sbr.rel (%p209) target = $region36
        $region35: #{siam_backbone_forward.1} parent=31 // pred_region
          %p212 = scmp.lt.s32.totalorder %s16, 1
          %s213 = scalar_select %p212, %s16, 1
          %s214 = smul.addr %s213, 64
          %s215 = smul.addr %s214, 4
          %s216 = scalar_lea.vmem %s0, %s215
        $region36: #{siam_backbone_forward.1} parent=31 // pred_fallthru
          _
      $region32: #{siam_backbone_forward.1} parent=5 // pred_fallthru
        _
      %p217 = scmp.le.s32.totalorder 1, %s16
      %p218 = scmp.lt.s32.totalorder %s16, 3
      %p219 = pnand %p217, %p218
      %p220 = pneg %p219
      // Predicated region
      $region37: #{siam_backbone_forward.1} parent=5 // pred_check
        _
      $region38: #{siam_backbone_forward.1} parent=5 // pred_check_branch
        %222 = sbr.rel (%p219) target = $region40
      $region39: #{siam_backbone_forward.1} parent=5 // pred_region
        %s223 = ssub.s32 %s16, 1
        %p224 = scmp.lt.s32.totalorder %s21, 1
        %s225 = scalar_select %p224, %s21, 1
        %s226 = smul.addr %s225, 64
        %s227 = smul.addr %s226, 4
        %s228 = scalar_lea.vmem %s0, %s227
        %p229 = pneg %p42
        %p230 = pneg %p39
        %p231 = pneg %p63
        %p232 = pneg %p60
        %p233 = pneg %p84
        %p234 = pneg %p81
        %p235 = pneg %p105
        %p236 = pneg %p102
        %p237 = pneg %p126
        %p238 = pneg %p123
        %p239 = pneg %p152
        %p240 = pneg %p149
        %p241 = scmp.lt.s32.totalorder %s21, 1
        %s242 = scalar_select %p241, %s21, 1
        %s243 = smul.addr %s242, 32
        %s244 = smul.addr %s243, 8
        %s245 = scalar_lea.vmem %s5, %s244
        %p246 = pneg %p178
        %p247 = pneg %p175
        %s248 = sand.u32 %s165, 1
        %s249 = scalar_lea.sflag [#allocation4], %s248
        %s250 = sand.u32 %s165, 1
        %s251 = smul.addr %s250, 64
        %s252 = scalar_lea.vmem [#allocation3], %s251
        %p253 = scmp.lt.s32.totalorder %s21, 1
        %s254 = scalar_select %p253, %s21, 1
        %s255 = smul.addr %s254, 64
        %s256 = smul.addr %s255, 4
        %s257 = scalar_lea.vmem %s0, %s256
        %p258 = scmp.lt.s32.totalorder %s21, 1
        %s259 = scalar_select %p258, %s21, 1
        %s260 = smul.addr %s259, 32
        %s261 = smul.addr %s260, 8
        %s262 = scalar_lea.vmem %s5, %s261
        %vm264 = vcmask 261120
        %265 = vst.msk [vmem:[#allocation2] sm:$0xff] %vm264, 0.0
        %266 = vst.msk [vmem:[#allocation2 + $0x8] sm:$0xff] %vm264, 0.0
        %267 = vst.msk [vmem:[#allocation2 + $0x90] sm:$0xff] %vm264, 0.0
        %268 = vst.msk [vmem:[#allocation2 + $0x98] sm:$0xff] %vm264, 0.0
        %269 = vst.msk [vmem:[#allocation2 + $0x120] sm:$0xff] %vm264, 0.0
        %270 = vst.msk [vmem:[#allocation2 + $0x128] sm:$0xff] %vm264, 0.0
        %271 = vst.msk [vmem:[#allocation2 + $0x1b0] sm:$0xff] %vm264, 0.0
        %272 = vst.msk [vmem:[#allocation2 + $0x1b8] sm:$0xff] %vm264, 0.0
        %273 = vst.msk [vmem:[#allocation2 + $0x240] sm:$0xff] %vm264, 0.0
        %274 = vst.msk [vmem:[#allocation2 + $0x248] sm:$0xff] %vm264, 0.0
        %275 = vst.msk [vmem:[#allocation2 + $0x2d0] sm:$0xff] %vm264, 0.0
        %276 = vst.msk [vmem:[#allocation2 + $0x2d8] sm:$0xff] %vm264, 0.0
        %277 = vst.msk [vmem:[#allocation2 + $0x360] sm:$0xff] %vm264, 0.0
        %278 = vst.msk [vmem:[#allocation2 + $0x368] sm:$0xff] %vm264, 0.0
        %279 = vst.msk [vmem:[#allocation2 + $0x3f0] sm:$0xff] %vm264, 0.0
        %280 = vst.msk [vmem:[#allocation2 + $0x3f8] sm:$0xff] %vm264, 0.0
        %vm281 = vcmask 253952
        %282 = vst.msk [vmem:[#allocation2 + $0x7] sm:$0x1] %vm281, 0.0
        %283 = vst.msk [vmem:[#allocation2 + $0x17] sm:$0x1] %vm281, 0.0
        %284 = vst.msk [vmem:[#allocation2 + $0x27] sm:$0x1] %vm281, 0.0
        %285 = vst.msk [vmem:[#allocation2 + $0x37] sm:$0x1] %vm281, 0.0
        %286 = vst.msk [vmem:[#allocation2 + $0x47] sm:$0x1] %vm281, 0.0
        %287 = vst.msk [vmem:[#allocation2 + $0x57] sm:$0x1] %vm281, 0.0
        %288 = vst.msk [vmem:[#allocation2 + $0x67] sm:$0x1] %vm281, 0.0
        %289 = vst.msk [vmem:[#allocation2 + $0x77] sm:$0x1] %vm281, 0.0
        %290 = vst.msk [vmem:[#allocation2 + $0x87] sm:$0x1] %vm281, 0.0
        %291 = vst.msk [vmem:[#allocation2 + $0x97] sm:$0x1] %vm281, 0.0
        %292 = vst.msk [vmem:[#allocation2 + $0xa7] sm:$0x1] %vm281, 0.0
        %293 = vst.msk [vmem:[#allocation2 + $0xb7] sm:$0x1] %vm281, 0.0
        %294 = vst.msk [vmem:[#allocation2 + $0xc7] sm:$0x1] %vm281, 0.0
        %295 = vst.msk [vmem:[#allocation2 + $0xd7] sm:$0x1] %vm281, 0.0
        %296 = vst.msk [vmem:[#allocation2 + $0xe7] sm:$0x1] %vm281, 0.0
        %297 = vst.msk [vmem:[#allocation2 + $0xf7] sm:$0x1] %vm281, 0.0
        %298 = vst.msk [vmem:[#allocation2 + $0x107] sm:$0x1] %vm281, 0.0
        %299 = vst.msk [vmem:[#allocation2 + $0x117] sm:$0x1] %vm281, 0.0
        %300 = vst.msk [vmem:[#allocation2 + $0x127] sm:$0x1] %vm281, 0.0
        %301 = vst.msk [vmem:[#allocation2 + $0x137] sm:$0x1] %vm281, 0.0
        %302 = vst.msk [vmem:[#allocation2 + $0x147] sm:$0x1] %vm281, 0.0
        %303 = vst.msk [vmem:[#allocation2 + $0x157] sm:$0x1] %vm281, 0.0
        %304 = vst.msk [vmem:[#allocation2 + $0x167] sm:$0x1] %vm281, 0.0
        %305 = vst.msk [vmem:[#allocation2 + $0x177] sm:$0x1] %vm281, 0.0
        %306 = vst.msk [vmem:[#allocation2 + $0x187] sm:$0x1] %vm281, 0.0
        %307 = vst.msk [vmem:[#allocation2 + $0x197] sm:$0x1] %vm281, 0.0
        %308 = vst.msk [vmem:[#allocation2 + $0x1a7] sm:$0x1] %vm281, 0.0
        %309 = vst.msk [vmem:[#allocation2 + $0x1b7] sm:$0x1] %vm281, 0.0
        %310 = vst.msk [vmem:[#allocation2 + $0x1c7] sm:$0x1] %vm281, 0.0
        %311 = vst.msk [vmem:[#allocation2 + $0x1d7] sm:$0x1] %vm281, 0.0
        %312 = vst.msk [vmem:[#allocation2 + $0x1e7] sm:$0x1] %vm281, 0.0
        %313 = vst.msk [vmem:[#allocation2 + $0x1f7] sm:$0x1] %vm281, 0.0
        %314 = vst.msk [vmem:[#allocation2 + $0x207] sm:$0x1] %vm281, 0.0
        %315 = vst.msk [vmem:[#allocation2 + $0x217] sm:$0x1] %vm281, 0.0
        %316 = vst.msk [vmem:[#allocation2 + $0x227] sm:$0x1] %vm281, 0.0
        %317 = vst.msk [vmem:[#allocation2 + $0x237] sm:$0x1] %vm281, 0.0
        %318 = vst.msk [vmem:[#allocation2 + $0x247] sm:$0x1] %vm281, 0.0
        %319 = vst.msk [vmem:[#allocation2 + $0x257] sm:$0x1] %vm281, 0.0
        %320 = vst.msk [vmem:[#allocation2 + $0x267] sm:$0x1] %vm281, 0.0
        %321 = vst.msk [vmem:[#allocation2 + $0x277] sm:$0x1] %vm281, 0.0
        %322 = vst.msk [vmem:[#allocation2 + $0x287] sm:$0x1] %vm281, 0.0
        %323 = vst.msk [vmem:[#allocation2 + $0x297] sm:$0x1] %vm281, 0.0
        %324 = vst.msk [vmem:[#allocation2 + $0x2a7] sm:$0x1] %vm281, 0.0
        %325 = vst.msk [vmem:[#allocation2 + $0x2b7] sm:$0x1] %vm281, 0.0
        %326 = vst.msk [vmem:[#allocation2 + $0x2c7] sm:$0x1] %vm281, 0.0
        %327 = vst.msk [vmem:[#allocation2 + $0x2d7] sm:$0x1] %vm281, 0.0
        %328 = vst.msk [vmem:[#allocation2 + $0x2e7] sm:$0x1] %vm281, 0.0
        %329 = vst.msk [vmem:[#allocation2 + $0x2f7] sm:$0x1] %vm281, 0.0
        %330 = vst.msk [vmem:[#allocation2 + $0x307] sm:$0x1] %vm281, 0.0
        %331 = vst.msk [vmem:[#allocation2 + $0x317] sm:$0x1] %vm281, 0.0
        %332 = vst.msk [vmem:[#allocation2 + $0x327] sm:$0x1] %vm281, 0.0
        %333 = vst.msk [vmem:[#allocation2 + $0x337] sm:$0x1] %vm281, 0.0
        %334 = vst.msk [vmem:[#allocation2 + $0x347] sm:$0x1] %vm281, 0.0
        %335 = vst.msk [vmem:[#allocation2 + $0x357] sm:$0x1] %vm281, 0.0
        %336 = vst.msk [vmem:[#allocation2 + $0x367] sm:$0x1] %vm281, 0.0
        %337 = vst.msk [vmem:[#allocation2 + $0x377] sm:$0x1] %vm281, 0.0
        %338 = vst.msk [vmem:[#allocation2 + $0x387] sm:$0x1] %vm281, 0.0
        %339 = vst.msk [vmem:[#allocation2 + $0x397] sm:$0x1] %vm281, 0.0
        %340 = vst.msk [vmem:[#allocation2 + $0x3a7] sm:$0x1] %vm281, 0.0
        %341 = vst.msk [vmem:[#allocation2 + $0x3b7] sm:$0x1] %vm281, 0.0
        %342 = vst.msk [vmem:[#allocation2 + $0x3c7] sm:$0x1] %vm281, 0.0
        %343 = vst.msk [vmem:[#allocation2 + $0x3d7] sm:$0x1] %vm281, 0.0
        %344 = vst.msk [vmem:[#allocation2 + $0x3e7] sm:$0x1] %vm281, 0.0
        %345 = vst.msk [vmem:[#allocation2 + $0x3f7] sm:$0x1] %vm281, 0.0
        %346 = vst.msk [vmem:[#allocation2 + $0x407] sm:$0x1] %vm281, 0.0
        %347 = vst.msk [vmem:[#allocation2 + $0x417] sm:$0x1] %vm281, 0.0
        %348 = vst.msk [vmem:[#allocation2 + $0x427] sm:$0x1] %vm281, 0.0
        %349 = vst.msk [vmem:[#allocation2 + $0x437] sm:$0x1] %vm281, 0.0
        %350 = vst.msk [vmem:[#allocation2 + $0x447] sm:$0x1] %vm281, 0.0
        %351 = vst.msk [vmem:[#allocation2 + $0x457] sm:$0x1] %vm281, 0.0
        %352 = vst.msk [vmem:[#allocation2 + $0x467] sm:$0x1] %vm281, 0.0
        %353 = vst.msk [vmem:[#allocation2 + $0x477] sm:$0x1] %vm281, 0.0
        %v354 = vld [vmem:[%s257] sm:$0xf]
        %v355 = vld [vmem:[%s257 + $0x4] sm:$0xf]
        %v356 = vld [vmem:[%s257 + $0x8] sm:$0xf]
        %v357 = vld [vmem:[%s257 + $0xc] sm:$0xf]
        %v358 = vld [vmem:[%s257 + $0x10] sm:$0xf]
        %v359 = vld [vmem:[%s257 + $0x14] sm:$0xf]
        %v360 = vld [vmem:[%s257 + $0x18] sm:$0xf]
        %v361 = vld [vmem:[%s257 + $0x1c] sm:$0xf]
        %v362 = vld [vmem:[%s257 + $0x20] sm:$0xf]
        %v363 = vld [vmem:[%s257 + $0x24] sm:$0xf]
        %v364 = vld [vmem:[%s257 + $0x28] sm:$0xf]
        %v365 = vld [vmem:[%s257 + $0x2c] sm:$0xf]
        %v366 = vld [vmem:[%s257 + $0x30] sm:$0xf]
        %v367 = vld [vmem:[%s257 + $0x34] sm:$0xf]
        %v368 = vld [vmem:[%s257 + $0x38] sm:$0xf]
        %v369 = vld [vmem:[%s257 + $0x3c] sm:$0xf]
        %v370 = vld [vmem:[%s257 + $0x40] sm:$0xf]
        %v371 = vld [vmem:[%s257 + $0x44] sm:$0xf]
        %v372 = vld [vmem:[%s257 + $0x48] sm:$0xf]
        %v373 = vld [vmem:[%s257 + $0x4c] sm:$0xf]
        %v374 = vld [vmem:[%s257 + $0x50] sm:$0xf]
        %v375 = vld [vmem:[%s257 + $0x54] sm:$0xf]
        %v376 = vld [vmem:[%s257 + $0x58] sm:$0xf]
        %v377 = vld [vmem:[%s257 + $0x5c] sm:$0xf]
        %v378 = vld [vmem:[%s257 + $0x60] sm:$0xf]
        %v379 = vld [vmem:[%s257 + $0x64] sm:$0xf]
        %v380 = vld [vmem:[%s257 + $0x68] sm:$0xf]
        %v381 = vld [vmem:[%s257 + $0x6c] sm:$0xf]
        %v382 = vld [vmem:[%s257 + $0x70] sm:$0xf]
        %v383 = vld [vmem:[%s257 + $0x74] sm:$0xf]
        %v384 = vld [vmem:[%s257 + $0x78] sm:$0xf]
        %v385 = vld [vmem:[%s257 + $0x7c] sm:$0xf]
        %v386 = vld [vmem:[%s257 + $0x80] sm:$0xf]
        %v387 = vld [vmem:[%s257 + $0x84] sm:$0xf]
        %v388 = vld [vmem:[%s257 + $0x88] sm:$0xf]
        %v389 = vld [vmem:[%s257 + $0x8c] sm:$0xf]
        %v390 = vld [vmem:[%s257 + $0x90] sm:$0xf]
        %v391 = vld [vmem:[%s257 + $0x94] sm:$0xf]
        %v392 = vld [vmem:[%s257 + $0x98] sm:$0xf]
        %v393 = vld [vmem:[%s257 + $0x9c] sm:$0xf]
        %v394 = vld [vmem:[%s257 + $0xa0] sm:$0xf]
        %v395 = vld [vmem:[%s257 + $0xa4] sm:$0xf]
        %v396 = vld [vmem:[%s257 + $0xa8] sm:$0xf]
        %v397 = vld [vmem:[%s257 + $0xac] sm:$0xf]
        %v398 = vld [vmem:[%s257 + $0xb0] sm:$0xf]
        %v399 = vld [vmem:[%s257 + $0xb4] sm:$0xf]
        %v400 = vld [vmem:[%s257 + $0xb8] sm:$0xf]
        %v401 = vld [vmem:[%s257 + $0xbc] sm:$0xf]
        %v402 = vld [vmem:[%s257 + $0xc0] sm:$0xf]
        %v403 = vld [vmem:[%s257 + $0xc4] sm:$0xf]
        %v404 = vld [vmem:[%s257 + $0xc8] sm:$0xf]
        %v405 = vld [vmem:[%s257 + $0xcc] sm:$0xf]
        %v406 = vld [vmem:[%s257 + $0xd0] sm:$0xf]
        %v407 = vld [vmem:[%s257 + $0xd4] sm:$0xf]
        %v408 = vld [vmem:[%s257 + $0xd8] sm:$0xf]
        %v409 = vld [vmem:[%s257 + $0xdc] sm:$0xf]
        %v410 = vld [vmem:[%s257 + $0xe0] sm:$0xf]
        %v411 = vld [vmem:[%s257 + $0xe4] sm:$0xf]
        %v412 = vld [vmem:[%s257 + $0xe8] sm:$0xf]
        %v413 = vld [vmem:[%s257 + $0xec] sm:$0xf]
        %v414 = vld [vmem:[%s257 + $0xf0] sm:$0xf]
        %v415 = vld [vmem:[%s257 + $0xf4] sm:$0xf]
        %v416 = vld [vmem:[%s257 + $0xf8] sm:$0xf]
        %v417 = vld [vmem:[%s257 + $0xfc] sm:$0xf]
        %v418 = vld [vmem:[%s1] sm:$0xf]
        %v419 = vld [vmem:[%s1 + $0x4] sm:$0xf]
        %v420 = vld [vmem:[%s1 + $0x8] sm:$0xf]
        %v421 = vld [vmem:[%s1 + $0xc] sm:$0xf]
        %v422 = vld [vmem:[%s1 + $0x10] sm:$0x3]
        %v423 = vld [vmem:[%s2] sm:$0x1]
        %v425 = vperm.slane %v423, 0
        %v491 = vunpack.c.l.b16 %v354
        %v492 = vunpack.c.l.b16 %v355
        %v493 = vunpack.c.l.b16 %v356
        %v494 = vunpack.c.l.b16 %v357
        %v495 = vunpack.c.l.b16 %v358
        %v496 = vunpack.c.l.b16 %v359
        %v497 = vunpack.c.l.b16 %v360
        %v498 = vunpack.c.l.b16 %v361
        %v499 = vunpack.c.l.b16 %v362
        %v500 = vunpack.c.l.b16 %v363
        %v501 = vunpack.c.l.b16 %v364
        %v502 = vunpack.c.l.b16 %v365
        %v503 = vunpack.c.l.b16 %v366
        %v504 = vunpack.c.l.b16 %v367
        %v505 = vunpack.c.l.b16 %v368
        %v506 = vunpack.c.l.b16 %v369
        %v507 = vunpack.c.l.b16 %v370
        %v508 = vunpack.c.l.b16 %v371
        %v509 = vunpack.c.l.b16 %v372
        %v510 = vunpack.c.l.b16 %v373
        %v511 = vunpack.c.l.b16 %v374
        %v512 = vunpack.c.l.b16 %v375
        %v513 = vunpack.c.l.b16 %v376
        %v514 = vunpack.c.l.b16 %v377
        %v515 = vunpack.c.l.b16 %v378
        %v516 = vunpack.c.l.b16 %v379
        %v517 = vunpack.c.l.b16 %v380
        %v518 = vunpack.c.l.b16 %v381
        %v519 = vunpack.c.l.b16 %v382
        %v520 = vunpack.c.l.b16 %v383
        %v521 = vunpack.c.l.b16 %v384
        %v522 = vunpack.c.l.b16 %v385
        %v523 = vunpack.c.l.b16 %v386
        %v524 = vunpack.c.l.b16 %v387
        %v525 = vunpack.c.l.b16 %v388
        %v526 = vunpack.c.l.b16 %v389
        %v527 = vunpack.c.l.b16 %v390
        %v528 = vunpack.c.l.b16 %v391
        %v529 = vunpack.c.l.b16 %v392
        %v530 = vunpack.c.l.b16 %v393
        %v531 = vunpack.c.l.b16 %v394
        %v532 = vunpack.c.l.b16 %v395
        %v533 = vunpack.c.l.b16 %v396
        %v534 = vunpack.c.l.b16 %v397
        %v535 = vunpack.c.l.b16 %v398
        %v536 = vunpack.c.l.b16 %v399
        %v537 = vunpack.c.l.b16 %v400
        %v538 = vunpack.c.l.b16 %v401
        %v539 = vunpack.c.l.b16 %v402
        %v540 = vunpack.c.l.b16 %v403
        %v541 = vunpack.c.l.b16 %v404
        %v542 = vunpack.c.l.b16 %v405
        %v543 = vunpack.c.l.b16 %v406
        %v544 = vunpack.c.l.b16 %v407
        %v545 = vunpack.c.l.b16 %v408
        %v546 = vunpack.c.l.b16 %v409
        %v547 = vunpack.c.l.b16 %v410
        %v548 = vunpack.c.l.b16 %v411
        %v549 = vunpack.c.l.b16 %v412
        %v550 = vunpack.c.l.b16 %v413
        %v551 = vunpack.c.l.b16 %v414
        %v552 = vunpack.c.l.b16 %v415
        %v553 = vunpack.c.l.b16 %v416
        %v554 = vunpack.c.l.b16 %v417
        %v555 = vpack.c.b16 %v492, %v491
        %v556 = vpack.c.b16 %v494, %v493
        %v557 = vpack.c.b16 %v496, %v495
        %v558 = vpack.c.b16 %v498, %v497
        %v559 = vpack.c.b16 %v500, %v499
        %v560 = vpack.c.b16 %v502, %v501
        %v561 = vpack.c.b16 %v504, %v503
        %v562 = vpack.c.b16 %v506, %v505
        %v563 = vpack.c.b16 %v508, %v507
        %v564 = vpack.c.b16 %v510, %v509
        %v565 = vpack.c.b16 %v512, %v511
        %v566 = vpack.c.b16 %v514, %v513
        %v567 = vpack.c.b16 %v516, %v515
        %v568 = vpack.c.b16 %v518, %v517
        %v569 = vpack.c.b16 %v520, %v519
        %v570 = vpack.c.b16 %v522, %v521
        %v571 = vpack.c.b16 %v524, %v523
        %v572 = vpack.c.b16 %v526, %v525
        %v573 = vpack.c.b16 %v528, %v527
        %v574 = vpack.c.b16 %v530, %v529
        %v575 = vpack.c.b16 %v532, %v531
        %v576 = vpack.c.b16 %v534, %v533
        %v577 = vpack.c.b16 %v536, %v535
        %v578 = vpack.c.b16 %v538, %v537
        %v579 = vpack.c.b16 %v540, %v539
        %v580 = vpack.c.b16 %v542, %v541
        %v581 = vpack.c.b16 %v544, %v543
        %v582 = vpack.c.b16 %v546, %v545
        %v583 = vpack.c.b16 %v548, %v547
        %v584 = vpack.c.b16 %v550, %v549
        %v585 = vpack.c.b16 %v552, %v551
        %v586 = vpack.c.b16 %v554, %v553
        %v592 = vunpack.c.l.b16 %v418
        %v593 = vunpack.c.l.b16 %v419
        %v594 = vunpack.c.l.b16 %v420
        %v595 = vunpack.c.l.b16 %v421
        %v596 = vunpack.c.l.b16 %v422
        %v597 = vpack.c.b16 %v593, %v592
        %v598 = vpack.c.b16 %v595, %v594
        %v599 = vpack.c.b16 %v596, %v596
        %vm602 = vcmask 293888
        %v604 = vsel %vm602, %v555, 0
        %v607 = vsel %vm602, %v556, 0
        %v610 = vsel %vm602, %v557, 0
        %v613 = vsel %vm602, %v558, 0
        %v616 = vsel %vm602, %v559, 0
        %v619 = vsel %vm602, %v560, 0
        %v622 = vsel %vm602, %v561, 0
        %v625 = vsel %vm602, %v562, 0
        %v628 = vsel %vm602, %v563, 0
        %v631 = vsel %vm602, %v564, 0
        %v634 = vsel %vm602, %v565, 0
        %v637 = vsel %vm602, %v566, 0
        %v640 = vsel %vm602, %v567, 0
        %v643 = vsel %vm602, %v568, 0
        %v646 = vsel %vm602, %v569, 0
        %v649 = vsel %vm602, %v570, 0
        %v652 = vsel %vm602, %v571, 0
        %v655 = vsel %vm602, %v572, 0
        %v658 = vsel %vm602, %v573, 0
        %v661 = vsel %vm602, %v574, 0
        %v664 = vsel %vm602, %v575, 0
        %v667 = vsel %vm602, %v576, 0
        %v670 = vsel %vm602, %v577, 0
        %v673 = vsel %vm602, %v578, 0
        %v676 = vsel %vm602, %v579, 0
        %v679 = vsel %vm602, %v580, 0
        %v682 = vsel %vm602, %v581, 0
        %v685 = vsel %vm602, %v582, 0
        %v688 = vsel %vm602, %v583, 0
        %v691 = vsel %vm602, %v584, 0
        %v694 = vsel %vm602, %v585, 0
        %v697 = vsel %vm602, %v586, 0
        %vm699 = vcmask 1041408
        %v701 = vsel %vm699, %v599, 0
        %703 = vmatpush.bf16.msra.mxu0 0
        %704 = vmatpush.bf16.msra.mxu0 0
        %705 = vmatpush.bf16.msra.mxu0 0
        %706 = vmatpush.bf16.msra.mxu0 0
        %707 = vmatpush.bf16.msra.mxu0 0
        %708 = vmatpush.bf16.msra.mxu0 %v701
        %709 = vmatpush.bf16.msra.mxu0 %v598
        %710 = vmatpush.bf16.msra.mxu0 %v597
        %711 = vmatmul.bf16.gmra.mxu0 %v604
        %v712 = vpop.f32.mrf.mxu0
        %v713 = vadd.f32 %v425, %v712
        %v714 = vpop.f32.mrf.mxu0
        %v715 = vadd.f32 %v425, %v714
        %716 = vmatmul.bf16.gmra.mxu0 %v607
        %v717 = vpop.f32.mrf.mxu0
        %v718 = vadd.f32 %v425, %v717
        %v719 = vpop.f32.mrf.mxu0
        %v720 = vadd.f32 %v425, %v719
        %721 = vmatmul.bf16.gmra.mxu0 %v610
        %v722 = vpop.f32.mrf.mxu0
        %v723 = vadd.f32 %v425, %v722
        %v724 = vpop.f32.mrf.mxu0
        %v725 = vadd.f32 %v425, %v724
        %726 = vmatmul.bf16.gmra.mxu0 %v613
        %v727 = vpop.f32.mrf.mxu0
        %v728 = vadd.f32 %v425, %v727
        %v729 = vpop.f32.mrf.mxu0
        %v730 = vadd.f32 %v425, %v729
        %731 = vmatmul.bf16.gmra.mxu0 %v616
        %v732 = vpop.f32.mrf.mxu0
        %v733 = vadd.f32 %v425, %v732
        %v734 = vpop.f32.mrf.mxu0
        %v735 = vadd.f32 %v425, %v734
        %736 = vmatmul.bf16.gmra.mxu0 %v619
        %v737 = vpop.f32.mrf.mxu0
        %v738 = vadd.f32 %v425, %v737
        %v739 = vpop.f32.mrf.mxu0
        %v740 = vadd.f32 %v425, %v739
        %741 = vmatmul.bf16.gmra.mxu0 %v622
        %v742 = vpop.f32.mrf.mxu0
        %v743 = vadd.f32 %v425, %v742
        %v744 = vpop.f32.mrf.mxu0
        %v745 = vadd.f32 %v425, %v744
        %746 = vmatmul.bf16.gmra.mxu0 %v625
        %v747 = vpop.f32.mrf.mxu0
        %v748 = vadd.f32 %v425, %v747
        %v749 = vpop.f32.mrf.mxu0
        %v750 = vadd.f32 %v425, %v749
        %751 = vmatmul.bf16.gmra.mxu0 %v628
        %v752 = vpop.f32.mrf.mxu0
        %v753 = vadd.f32 %v425, %v752
        %v754 = vpop.f32.mrf.mxu0
        %v755 = vadd.f32 %v425, %v754
        %756 = vmatmul.bf16.gmra.mxu0 %v631
        %v757 = vpop.f32.mrf.mxu0
        %v758 = vadd.f32 %v425, %v757
        %v759 = vpop.f32.mrf.mxu0
        %v760 = vadd.f32 %v425, %v759
        %761 = vmatmul.bf16.gmra.mxu0 %v634
        %v762 = vpop.f32.mrf.mxu0
        %v763 = vadd.f32 %v425, %v762
        %v764 = vpop.f32.mrf.mxu0
        %v765 = vadd.f32 %v425, %v764
        %766 = vmatmul.bf16.gmra.mxu0 %v637
        %v767 = vpop.f32.mrf.mxu0
        %v768 = vadd.f32 %v425, %v767
        %v769 = vpop.f32.mrf.mxu0
        %v770 = vadd.f32 %v425, %v769
        %771 = vmatmul.bf16.gmra.mxu0 %v640
        %v772 = vpop.f32.mrf.mxu0
        %v773 = vadd.f32 %v425, %v772
        %v774 = vpop.f32.mrf.mxu0
        %v775 = vadd.f32 %v425, %v774
        %776 = vmatmul.bf16.gmra.mxu0 %v643
        %v777 = vpop.f32.mrf.mxu0
        %v778 = vadd.f32 %v425, %v777
        %v779 = vpop.f32.mrf.mxu0
        %v780 = vadd.f32 %v425, %v779
        %781 = vmatmul.bf16.gmra.mxu0 %v646
        %v782 = vpop.f32.mrf.mxu0
        %v783 = vadd.f32 %v425, %v782
        %v784 = vpop.f32.mrf.mxu0
        %v785 = vadd.f32 %v425, %v784
        %786 = vmatmul.bf16.gmra.mxu0 %v649
        %v787 = vpop.f32.mrf.mxu0
        %v788 = vadd.f32 %v425, %v787
        %v789 = vpop.f32.mrf.mxu0
        %v790 = vadd.f32 %v425, %v789
        %791 = vmatmul.bf16.gmra.mxu0 %v652
        %v792 = vpop.f32.mrf.mxu0
        %v793 = vadd.f32 %v425, %v792
        %v794 = vpop.f32.mrf.mxu0
        %v795 = vadd.f32 %v425, %v794
        %796 = vmatmul.bf16.gmra.mxu0 %v655
        %v797 = vpop.f32.mrf.mxu0
        %v798 = vadd.f32 %v425, %v797
        %v799 = vpop.f32.mrf.mxu0
        %v800 = vadd.f32 %v425, %v799
        %801 = vmatmul.bf16.gmra.mxu0 %v658
        %v802 = vpop.f32.mrf.mxu0
        %v803 = vadd.f32 %v425, %v802
        %v804 = vpop.f32.mrf.mxu0
        %v805 = vadd.f32 %v425, %v804
        %806 = vmatmul.bf16.gmra.mxu0 %v661
        %v807 = vpop.f32.mrf.mxu0
        %v808 = vadd.f32 %v425, %v807
        %v809 = vpop.f32.mrf.mxu0
        %v810 = vadd.f32 %v425, %v809
        %811 = vmatmul.bf16.gmra.mxu0 %v664
        %v812 = vpop.f32.mrf.mxu0
        %v813 = vadd.f32 %v425, %v812
        %v814 = vpop.f32.mrf.mxu0
        %v815 = vadd.f32 %v425, %v814
        %816 = vmatmul.bf16.gmra.mxu0 %v667
        %v817 = vpop.f32.mrf.mxu0
        %v818 = vadd.f32 %v425, %v817
        %v819 = vpop.f32.mrf.mxu0
        %v820 = vadd.f32 %v425, %v819
        %821 = vmatmul.bf16.gmra.mxu0 %v670
        %v822 = vpop.f32.mrf.mxu0
        %v823 = vadd.f32 %v425, %v822
        %v824 = vpop.f32.mrf.mxu0
        %v825 = vadd.f32 %v425, %v824
        %826 = vmatmul.bf16.gmra.mxu0 %v673
        %v827 = vpop.f32.mrf.mxu0
        %v828 = vadd.f32 %v425, %v827
        %v829 = vpop.f32.mrf.mxu0
        %v830 = vadd.f32 %v425, %v829
        %831 = vmatmul.bf16.gmra.mxu0 %v676
        %v832 = vpop.f32.mrf.mxu0
        %v833 = vadd.f32 %v425, %v832
        %v834 = vpop.f32.mrf.mxu0
        %v835 = vadd.f32 %v425, %v834
        %836 = vmatmul.bf16.gmra.mxu0 %v679
        %v837 = vpop.f32.mrf.mxu0
        %v838 = vadd.f32 %v425, %v837
        %v839 = vpop.f32.mrf.mxu0
        %v840 = vadd.f32 %v425, %v839
        %841 = vmatmul.bf16.gmra.mxu0 %v682
        %v842 = vpop.f32.mrf.mxu0
        %v843 = vadd.f32 %v425, %v842
        %v844 = vpop.f32.mrf.mxu0
        %v845 = vadd.f32 %v425, %v844
        %846 = vmatmul.bf16.gmra.mxu0 %v685
        %v847 = vpop.f32.mrf.mxu0
        %v848 = vadd.f32 %v425, %v847
        %v849 = vpop.f32.mrf.mxu0
        %v850 = vadd.f32 %v425, %v849
        %851 = vmatmul.bf16.gmra.mxu0 %v688
        %v852 = vpop.f32.mrf.mxu0
        %v853 = vadd.f32 %v425, %v852
        %v854 = vpop.f32.mrf.mxu0
        %v855 = vadd.f32 %v425, %v854
        %856 = vmatmul.bf16.gmra.mxu0 %v691
        %v857 = vpop.f32.mrf.mxu0
        %v858 = vadd.f32 %v425, %v857
        %v859 = vpop.f32.mrf.mxu0
        %v860 = vadd.f32 %v425, %v859
        %861 = vmatmul.bf16.gmra.mxu0 %v694
        %v862 = vpop.f32.mrf.mxu0
        %v863 = vadd.f32 %v425, %v862
        %v864 = vpop.f32.mrf.mxu0
        %v865 = vadd.f32 %v425, %v864
        %866 = vmatmul.bf16.gmra.mxu0 %v697
        %v867 = vpop.f32.mrf.mxu0
        %v868 = vadd.f32 %v425, %v867
        %v869 = vpop.f32.mrf.mxu0
        %v870 = vadd.f32 %v425, %v869
        %871 = vdwg.mxu0
        %v872 = vmax.f32 %v713, 0.0
        %v873 = vmax.f32 %v715, 0.0
        %v874 = vmax.f32 %v718, 0.0
        %v875 = vmax.f32 %v720, 0.0
        %v876 = vmax.f32 %v723, 0.0
        %v877 = vmax.f32 %v725, 0.0
        %v878 = vmax.f32 %v728, 0.0
        %v879 = vmax.f32 %v730, 0.0
        %v880 = vmax.f32 %v733, 0.0
        %v881 = vmax.f32 %v735, 0.0
        %v882 = vmax.f32 %v738, 0.0
        %v883 = vmax.f32 %v740, 0.0
        %v884 = vmax.f32 %v743, 0.0
        %v885 = vmax.f32 %v745, 0.0
        %v886 = vmax.f32 %v748, 0.0
        %v887 = vmax.f32 %v750, 0.0
        %v888 = vmax.f32 %v753, 0.0
        %v889 = vmax.f32 %v755, 0.0
        %v890 = vmax.f32 %v758, 0.0
        %v891 = vmax.f32 %v760, 0.0
        %v892 = vmax.f32 %v763, 0.0
        %v893 = vmax.f32 %v765, 0.0
        %v894 = vmax.f32 %v768, 0.0
        %v895 = vmax.f32 %v770, 0.0
        %v896 = vmax.f32 %v773, 0.0
        %v897 = vmax.f32 %v775, 0.0
        %v898 = vmax.f32 %v778, 0.0
        %v899 = vmax.f32 %v780, 0.0
        %v900 = vmax.f32 %v783, 0.0
        %v901 = vmax.f32 %v785, 0.0
        %v902 = vmax.f32 %v788, 0.0
        %v903 = vmax.f32 %v790, 0.0
        %v904 = vmax.f32 %v793, 0.0
        %v905 = vmax.f32 %v795, 0.0
        %v906 = vmax.f32 %v798, 0.0
        %v907 = vmax.f32 %v800, 0.0
        %v908 = vmax.f32 %v803, 0.0
        %v909 = vmax.f32 %v805, 0.0
        %v910 = vmax.f32 %v808, 0.0
        %v911 = vmax.f32 %v810, 0.0
        %v912 = vmax.f32 %v813, 0.0
        %v913 = vmax.f32 %v815, 0.0
        %v914 = vmax.f32 %v818, 0.0
        %v915 = vmax.f32 %v820, 0.0
        %v916 = vmax.f32 %v823, 0.0
        %v917 = vmax.f32 %v825, 0.0
        %v918 = vmax.f32 %v828, 0.0
        %v919 = vmax.f32 %v830, 0.0
        %v920 = vmax.f32 %v833, 0.0
        %v921 = vmax.f32 %v835, 0.0
        %v922 = vmax.f32 %v838, 0.0
        %v923 = vmax.f32 %v840, 0.0
        %v924 = vmax.f32 %v843, 0.0
        %v925 = vmax.f32 %v845, 0.0
        %v926 = vmax.f32 %v848, 0.0
        %v927 = vmax.f32 %v850, 0.0
        %v928 = vmax.f32 %v853, 0.0
        %v929 = vmax.f32 %v855, 0.0
        %v930 = vmax.f32 %v858, 0.0
        %v931 = vmax.f32 %v860, 0.0
        %v932 = vmax.f32 %v863, 0.0
        %v933 = vmax.f32 %v865, 0.0
        %v934 = vmax.f32 %v868, 0.0
        %v935 = vmax.f32 %v870, 0.0
        %s936 = scalar_lea.vmem [#allocation2], 16
        %937 = vst.msk [vmem:[%s936 + $0x8] sm:$0xff] %vm264, %v872
        %938 = vst.msk [vmem:[%s936 + $0x18] sm:$0xff] %vm264, %v873
        %939 = vst.msk [vmem:[%s936 + $0x28] sm:$0xff] %vm264, %v874
        %940 = vst.msk [vmem:[%s936 + $0x38] sm:$0xff] %vm264, %v875
        %941 = vst.msk [vmem:[%s936 + $0x48] sm:$0xff] %vm264, %v876
        %942 = vst.msk [vmem:[%s936 + $0x58] sm:$0xff] %vm264, %v877
        %943 = vst.msk [vmem:[%s936 + $0x68] sm:$0xff] %vm264, %v878
        %944 = vst.msk [vmem:[%s936 + $0x78] sm:$0xff] %vm264, %v879
        %945 = vst.msk [vmem:[%s936 + $0x98] sm:$0xff] %vm264, %v880
        %946 = vst.msk [vmem:[%s936 + $0xa8] sm:$0xff] %vm264, %v881
        %947 = vst.msk [vmem:[%s936 + $0xb8] sm:$0xff] %vm264, %v882
        %948 = vst.msk [vmem:[%s936 + $0xc8] sm:$0xff] %vm264, %v883
        %949 = vst.msk [vmem:[%s936 + $0xd8] sm:$0xff] %vm264, %v884
        %950 = vst.msk [vmem:[%s936 + $0xe8] sm:$0xff] %vm264, %v885
        %951 = vst.msk [vmem:[%s936 + $0xf8] sm:$0xff] %vm264, %v886
        %952 = vst.msk [vmem:[%s936 + $0x108] sm:$0xff] %vm264, %v887
        %953 = vst.msk [vmem:[%s936 + $0x128] sm:$0xff] %vm264, %v888
        %954 = vst.msk [vmem:[%s936 + $0x138] sm:$0xff] %vm264, %v889
        %955 = vst.msk [vmem:[%s936 + $0x148] sm:$0xff] %vm264, %v890
        %956 = vst.msk [vmem:[%s936 + $0x158] sm:$0xff] %vm264, %v891
        %957 = vst.msk [vmem:[%s936 + $0x168] sm:$0xff] %vm264, %v892
        %958 = vst.msk [vmem:[%s936 + $0x178] sm:$0xff] %vm264, %v893
        %959 = vst.msk [vmem:[%s936 + $0x188] sm:$0xff] %vm264, %v894
        %960 = vst.msk [vmem:[%s936 + $0x198] sm:$0xff] %vm264, %v895
        %961 = vst.msk [vmem:[%s936 + $0x1b8] sm:$0xff] %vm264, %v896
        %962 = vst.msk [vmem:[%s936 + $0x1c8] sm:$0xff] %vm264, %v897
        %963 = vst.msk [vmem:[%s936 + $0x1d8] sm:$0xff] %vm264, %v898
        %964 = vst.msk [vmem:[%s936 + $0x1e8] sm:$0xff] %vm264, %v899
        %965 = vst.msk [vmem:[%s936 + $0x1f8] sm:$0xff] %vm264, %v900
        %966 = vst.msk [vmem:[%s936 + $0x208] sm:$0xff] %vm264, %v901
        %967 = vst.msk [vmem:[%s936 + $0x218] sm:$0xff] %vm264, %v902
        %968 = vst.msk [vmem:[%s936 + $0x228] sm:$0xff] %vm264, %v903
        %969 = vst.msk [vmem:[%s936 + $0x248] sm:$0xff] %vm264, %v904
        %970 = vst.msk [vmem:[%s936 + $0x258] sm:$0xff] %vm264, %v905
        %971 = vst.msk [vmem:[%s936 + $0x268] sm:$0xff] %vm264, %v906
        %972 = vst.msk [vmem:[%s936 + $0x278] sm:$0xff] %vm264, %v907
        %973 = vst.msk [vmem:[%s936 + $0x288] sm:$0xff] %vm264, %v908
        %974 = vst.msk [vmem:[%s936 + $0x298] sm:$0xff] %vm264, %v909
        %975 = vst.msk [vmem:[%s936 + $0x2a8] sm:$0xff] %vm264, %v910
        %976 = vst.msk [vmem:[%s936 + $0x2b8] sm:$0xff] %vm264, %v911
        %977 = vst.msk [vmem:[%s936 + $0x2d8] sm:$0xff] %vm264, %v912
        %978 = vst.msk [vmem:[%s936 + $0x2e8] sm:$0xff] %vm264, %v913
        %979 = vst.msk [vmem:[%s936 + $0x2f8] sm:$0xff] %vm264, %v914
        %980 = vst.msk [vmem:[%s936 + $0x308] sm:$0xff] %vm264, %v915
        %981 = vst.msk [vmem:[%s936 + $0x318] sm:$0xff] %vm264, %v916
        %982 = vst.msk [vmem:[%s936 + $0x328] sm:$0xff] %vm264, %v917
        %983 = vst.msk [vmem:[%s936 + $0x338] sm:$0xff] %vm264, %v918
        %984 = vst.msk [vmem:[%s936 + $0x348] sm:$0xff] %vm264, %v919
        %985 = vst.msk [vmem:[%s936 + $0x368] sm:$0xff] %vm264, %v920
        %986 = vst.msk [vmem:[%s936 + $0x378] sm:$0xff] %vm264, %v921
        %987 = vst.msk [vmem:[%s936 + $0x388] sm:$0xff] %vm264, %v922
        %988 = vst.msk [vmem:[%s936 + $0x398] sm:$0xff] %vm264, %v923
        %989 = vst.msk [vmem:[%s936 + $0x3a8] sm:$0xff] %vm264, %v924
        %990 = vst.msk [vmem:[%s936 + $0x3b8] sm:$0xff] %vm264, %v925
        %991 = vst.msk [vmem:[%s936 + $0x3c8] sm:$0xff] %vm264, %v926
        %992 = vst.msk [vmem:[%s936 + $0x3d8] sm:$0xff] %vm264, %v927
        %993 = vst.msk [vmem:[%s936 + $0x3f8] sm:$0xff] %vm264, %v928
        %994 = vst.msk [vmem:[%s936 + $0x408] sm:$0xff] %vm264, %v929
        %995 = vst.msk [vmem:[%s936 + $0x418] sm:$0xff] %vm264, %v930
        %996 = vst.msk [vmem:[%s936 + $0x428] sm:$0xff] %vm264, %v931
        %997 = vst.msk [vmem:[%s936 + $0x438] sm:$0xff] %vm264, %v932
        %998 = vst.msk [vmem:[%s936 + $0x448] sm:$0xff] %vm264, %v933
        %999 = vst.msk [vmem:[%s936 + $0x458] sm:$0xff] %vm264, %v934
        %1000 = vst.msk [vmem:[%s936 + $0x468] sm:$0xff] %vm264, %v935
        %1001 = vst.msk [vmem:[%s262] sm:$0xff] %vm264, %v872
        %1002 = vst.msk [vmem:[%s262 + $0x8] sm:$0xff] %vm264, %v873
        %1003 = vst.msk [vmem:[%s262 + $0x10] sm:$0xff] %vm264, %v874
        %1004 = vst.msk [vmem:[%s262 + $0x18] sm:$0xff] %vm264, %v875
        %1005 = vst.msk [vmem:[%s262 + $0x20] sm:$0xff] %vm264, %v876
        %1006 = vst.msk [vmem:[%s262 + $0x28] sm:$0xff] %vm264, %v877
        %1007 = vst.msk [vmem:[%s262 + $0x30] sm:$0xff] %vm264, %v878
        %1008 = vst.msk [vmem:[%s262 + $0x38] sm:$0xff] %vm264, %v879
        %1009 = vst.msk [vmem:[%s262 + $0x40] sm:$0xff] %vm264, %v888
        %1010 = vst.msk [vmem:[%s262 + $0x48] sm:$0xff] %vm264, %v889
        %1011 = vst.msk [vmem:[%s262 + $0x50] sm:$0xff] %vm264, %v890
        %1012 = vst.msk [vmem:[%s262 + $0x58] sm:$0xff] %vm264, %v891
        %1013 = vst.msk [vmem:[%s262 + $0x60] sm:$0xff] %vm264, %v892
        %1014 = vst.msk [vmem:[%s262 + $0x68] sm:$0xff] %vm264, %v893
        %1015 = vst.msk [vmem:[%s262 + $0x70] sm:$0xff] %vm264, %v894
        %1016 = vst.msk [vmem:[%s262 + $0x78] sm:$0xff] %vm264, %v895
        %1017 = vst.msk [vmem:[%s262 + $0x80] sm:$0xff] %vm264, %v904
        %1018 = vst.msk [vmem:[%s262 + $0x88] sm:$0xff] %vm264, %v905
        %1019 = vst.msk [vmem:[%s262 + $0x90] sm:$0xff] %vm264, %v906
        %1020 = vst.msk [vmem:[%s262 + $0x98] sm:$0xff] %vm264, %v907
        %1021 = vst.msk [vmem:[%s262 + $0xa0] sm:$0xff] %vm264, %v908
        %1022 = vst.msk [vmem:[%s262 + $0xa8] sm:$0xff] %vm264, %v909
        %1023 = vst.msk [vmem:[%s262 + $0xb0] sm:$0xff] %vm264, %v910
        %1024 = vst.msk [vmem:[%s262 + $0xb8] sm:$0xff] %vm264, %v911
        %1025 = vst.msk [vmem:[%s262 + $0xc0] sm:$0xff] %vm264, %v920
        %1026 = vst.msk [vmem:[%s262 + $0xc8] sm:$0xff] %vm264, %v921
        %1027 = vst.msk [vmem:[%s262 + $0xd0] sm:$0xff] %vm264, %v922
        %1028 = vst.msk [vmem:[%s262 + $0xd8] sm:$0xff] %vm264, %v923
        %1029 = vst.msk [vmem:[%s262 + $0xe0] sm:$0xff] %vm264, %v924
        %1030 = vst.msk [vmem:[%s262 + $0xe8] sm:$0xff] %vm264, %v925
        %1031 = vst.msk [vmem:[%s262 + $0xf0] sm:$0xff] %vm264, %v926
        %1032 = vst.msk [vmem:[%s262 + $0xf8] sm:$0xff] %vm264, %v927
        %1065 = vrot.lane.b32.xlu0 %v880, 32
        %v1066 = vpop.permute.xlu0 %1065
        %1067 = vrot.lane.b32.xlu0 %v881, 32
        %v1068 = vpop.permute.xlu0 %1067
        %1069 = vrot.lane.b32.xlu0 %v882, 32
        %v1070 = vpop.permute.xlu0 %1069
        %1071 = vrot.lane.b32.xlu0 %v883, 32
        %v1072 = vpop.permute.xlu0 %1071
        %1073 = vrot.lane.b32.xlu0 %v884, 32
        %v1074 = vpop.permute.xlu0 %1073
        %1075 = vrot.lane.b32.xlu0 %v885, 32
        %v1076 = vpop.permute.xlu0 %1075
        %1077 = vrot.lane.b32.xlu0 %v886, 32
        %v1078 = vpop.permute.xlu0 %1077
        %1079 = vrot.lane.b32.xlu0 %v887, 32
        %v1080 = vpop.permute.xlu0 %1079
        %1081 = vrot.lane.b32.xlu0 %v896, 32
        %v1082 = vpop.permute.xlu0 %1081
        %1083 = vrot.lane.b32.xlu0 %v897, 32
        %v1084 = vpop.permute.xlu0 %1083
        %1085 = vrot.lane.b32.xlu0 %v898, 32
        %v1086 = vpop.permute.xlu0 %1085
        %1087 = vrot.lane.b32.xlu0 %v899, 32
        %v1088 = vpop.permute.xlu0 %1087
        %1089 = vrot.lane.b32.xlu0 %v900, 32
        %v1090 = vpop.permute.xlu0 %1089
        %1091 = vrot.lane.b32.xlu0 %v901, 32
        %v1092 = vpop.permute.xlu0 %1091
        %1093 = vrot.lane.b32.xlu0 %v902, 32
        %v1094 = vpop.permute.xlu0 %1093
        %1095 = vrot.lane.b32.xlu0 %v903, 32
        %v1096 = vpop.permute.xlu0 %1095
        %1097 = vrot.lane.b32.xlu0 %v912, 32
        %v1098 = vpop.permute.xlu0 %1097
        %1099 = vrot.lane.b32.xlu0 %v913, 32
        %v1100 = vpop.permute.xlu0 %1099
        %1101 = vrot.lane.b32.xlu0 %v914, 32
        %v1102 = vpop.permute.xlu0 %1101
        %1103 = vrot.lane.b32.xlu0 %v915, 32
        %v1104 = vpop.permute.xlu0 %1103
        %1105 = vrot.lane.b32.xlu0 %v916, 32
        %v1106 = vpop.permute.xlu0 %1105
        %1107 = vrot.lane.b32.xlu0 %v917, 32
        %v1108 = vpop.permute.xlu0 %1107
        %1109 = vrot.lane.b32.xlu0 %v918, 32
        %v1110 = vpop.permute.xlu0 %1109
        %1111 = vrot.lane.b32.xlu0 %v919, 32
        %v1112 = vpop.permute.xlu0 %1111
        %1113 = vrot.lane.b32.xlu0 %v928, 32
        %v1114 = vpop.permute.xlu0 %1113
        %1115 = vrot.lane.b32.xlu0 %v929, 32
        %v1116 = vpop.permute.xlu0 %1115
        %1117 = vrot.lane.b32.xlu0 %v930, 32
        %v1118 = vpop.permute.xlu0 %1117
        %1119 = vrot.lane.b32.xlu0 %v931, 32
        %v1120 = vpop.permute.xlu0 %1119
        %1121 = vrot.lane.b32.xlu0 %v932, 32
        %v1122 = vpop.permute.xlu0 %1121
        %1123 = vrot.lane.b32.xlu0 %v933, 32
        %v1124 = vpop.permute.xlu0 %1123
        %1125 = vrot.lane.b32.xlu0 %v934, 32
        %v1126 = vpop.permute.xlu0 %1125
        %1127 = vrot.lane.b32.xlu0 %v935, 32
        %v1128 = vpop.permute.xlu0 %1127
        %vm1161 = vcmask 523520
        %1162 = vst.msk [vmem:[%s262] sm:$0xff] %vm1161, %v1066
        %1163 = vst.msk [vmem:[%s262 + $0x8] sm:$0xff] %vm1161, %v1068
        %1164 = vst.msk [vmem:[%s262 + $0x10] sm:$0xff] %vm1161, %v1070
        %1165 = vst.msk [vmem:[%s262 + $0x18] sm:$0xff] %vm1161, %v1072
        %1166 = vst.msk [vmem:[%s262 + $0x20] sm:$0xff] %vm1161, %v1074
        %1167 = vst.msk [vmem:[%s262 + $0x28] sm:$0xff] %vm1161, %v1076
        %1168 = vst.msk [vmem:[%s262 + $0x30] sm:$0xff] %vm1161, %v1078
        %1169 = vst.msk [vmem:[%s262 + $0x38] sm:$0xff] %vm1161, %v1080
        %1170 = vst.msk [vmem:[%s262 + $0x40] sm:$0xff] %vm1161, %v1082
        %1171 = vst.msk [vmem:[%s262 + $0x48] sm:$0xff] %vm1161, %v1084
        %1172 = vst.msk [vmem:[%s262 + $0x50] sm:$0xff] %vm1161, %v1086
        %1173 = vst.msk [vmem:[%s262 + $0x58] sm:$0xff] %vm1161, %v1088
        %1174 = vst.msk [vmem:[%s262 + $0x60] sm:$0xff] %vm1161, %v1090
        %1175 = vst.msk [vmem:[%s262 + $0x68] sm:$0xff] %vm1161, %v1092
        %1176 = vst.msk [vmem:[%s262 + $0x70] sm:$0xff] %vm1161, %v1094
        %1177 = vst.msk [vmem:[%s262 + $0x78] sm:$0xff] %vm1161, %v1096
        %1178 = vst.msk [vmem:[%s262 + $0x80] sm:$0xff] %vm1161, %v1098
        %1179 = vst.msk [vmem:[%s262 + $0x88] sm:$0xff] %vm1161, %v1100
        %1180 = vst.msk [vmem:[%s262 + $0x90] sm:$0xff] %vm1161, %v1102
        %1181 = vst.msk [vmem:[%s262 + $0x98] sm:$0xff] %vm1161, %v1104
        %1182 = vst.msk [vmem:[%s262 + $0xa0] sm:$0xff] %vm1161, %v1106
        %1183 = vst.msk [vmem:[%s262 + $0xa8] sm:$0xff] %vm1161, %v1108
        %1184 = vst.msk [vmem:[%s262 + $0xb0] sm:$0xff] %vm1161, %v1110
        %1185 = vst.msk [vmem:[%s262 + $0xb8] sm:$0xff] %vm1161, %v1112
        %1186 = vst.msk [vmem:[%s262 + $0xc0] sm:$0xff] %vm1161, %v1114
        %1187 = vst.msk [vmem:[%s262 + $0xc8] sm:$0xff] %vm1161, %v1116
        %1188 = vst.msk [vmem:[%s262 + $0xd0] sm:$0xff] %vm1161, %v1118
        %1189 = vst.msk [vmem:[%s262 + $0xd8] sm:$0xff] %vm1161, %v1120
        %1190 = vst.msk [vmem:[%s262 + $0xe0] sm:$0xff] %vm1161, %v1122
        %1191 = vst.msk [vmem:[%s262 + $0xe8] sm:$0xff] %vm1161, %v1124
        %1192 = vst.msk [vmem:[%s262 + $0xf0] sm:$0xff] %vm1161, %v1126
        %1193 = vst.msk [vmem:[%s262 + $0xf8] sm:$0xff] %vm1161, %v1128
        %s1194 = scalar_lea.vmem [#allocation2], 864
        %v1195 = vld [vmem:[%s1194 + $0x7] sm:$0xff]
        %v1196 = vld [vmem:[%s1194 + $0x17] sm:$0xff]
        %v1197 = vld [vmem:[%s1194 + $0x27] sm:$0xff]
        %v1198 = vld [vmem:[%s1194 + $0x37] sm:$0xff]
        %v1199 = vld [vmem:[%s1194 + $0x47] sm:$0xff]
        %v1200 = vld [vmem:[%s1194 + $0x57] sm:$0xff]
        %v1201 = vld [vmem:[%s1194 + $0x67] sm:$0xff]
        %v1202 = vld [vmem:[%s1194 + $0x77] sm:$0xff]
        %v1203 = vld [vmem:[%s1194 + $0x97] sm:$0xff]
        %v1204 = vld [vmem:[%s1194 + $0xa7] sm:$0xff]
        %v1205 = vld [vmem:[%s1194 + $0xb7] sm:$0xff]
        %v1206 = vld [vmem:[%s1194 + $0xc7] sm:$0xff]
        %v1207 = vld [vmem:[%s1194 + $0xd7] sm:$0xff]
        %v1208 = vld [vmem:[%s1194 + $0xe7] sm:$0xff]
        %v1209 = vld [vmem:[%s1194 + $0xf7] sm:$0xff]
        %v1210 = vld [vmem:[%s1194 + $0x107] sm:$0xff]
        %v1211 = vpack.c.bf16 %v1196, %v1195
        %v1212 = vpack.c.bf16 %v1198, %v1197
        %v1213 = vpack.c.bf16 %v1200, %v1199
        %v1214 = vpack.c.bf16 %v1202, %v1201
        %v1215 = vpack.c.bf16 %v1204, %v1203
        %v1216 = vpack.c.bf16 %v1206, %v1205
        %v1217 = vpack.c.bf16 %v1208, %v1207
        %v1218 = vpack.c.bf16 %v1210, %v1209
        %v1219 = vld [vmem:[%s3] sm:$0xf]
        %v1220 = vld [vmem:[%s3 + $0x4] sm:$0xf]
        %v1221 = vld [vmem:[%s3 + $0x8] sm:$0xf]
        %v1222 = vld [vmem:[%s3 + $0xc] sm:$0xf]
        %s1223 = scalar_lea.vmem [#allocation2], 576
        %v1224 = vld [vmem:[%s1223 + $0x8] sm:$0xff]
        %v1225 = vld [vmem:[%s1223 + $0x18] sm:$0xff]
        %v1226 = vld [vmem:[%s1223 + $0x28] sm:$0xff]
        %v1227 = vld [vmem:[%s1223 + $0x38] sm:$0xff]
        %v1228 = vld [vmem:[%s1223 + $0x48] sm:$0xff]
        %v1229 = vld [vmem:[%s1223 + $0x58] sm:$0xff]
        %v1230 = vld [vmem:[%s1223 + $0x68] sm:$0xff]
        %v1231 = vld [vmem:[%s1223 + $0x78] sm:$0xff]
        %v1232 = vld [vmem:[%s1223 + $0x98] sm:$0xff]
        %v1233 = vld [vmem:[%s1223 + $0xa8] sm:$0xff]
        %v1234 = vld [vmem:[%s1223 + $0xb8] sm:$0xff]
        %v1235 = vld [vmem:[%s1223 + $0xc8] sm:$0xff]
        %v1236 = vld [vmem:[%s1223 + $0xd8] sm:$0xff]
        %v1237 = vld [vmem:[%s1223 + $0xe8] sm:$0xff]
        %v1238 = vld [vmem:[%s1223 + $0xf8] sm:$0xff]
        %v1239 = vld [vmem:[%s1223 + $0x108] sm:$0xff]
        %v1240 = vpack.c.bf16 %v1225, %v1224
        %v1241 = vpack.c.bf16 %v1227, %v1226
        %v1242 = vpack.c.bf16 %v1229, %v1228
        %v1243 = vpack.c.bf16 %v1231, %v1230
        %v1244 = vpack.c.bf16 %v1233, %v1232
        %v1245 = vpack.c.bf16 %v1235, %v1234
        %v1246 = vpack.c.bf16 %v1237, %v1236
        %v1247 = vpack.c.bf16 %v1239, %v1238
        %s1248 = scalar_lea.vmem %s3, 16
        %v1249 = vld [vmem:[%s1248] sm:$0xf]
        %v1250 = vld [vmem:[%s1248 + $0x4] sm:$0xf]
        %v1251 = vld [vmem:[%s1248 + $0x8] sm:$0xf]
        %v1252 = vld [vmem:[%s1248 + $0xc] sm:$0xf]
        %v1257 = vunpack.c.l.b16 %v1249
        %v1258 = vunpack.c.l.b16 %v1250
        %v1259 = vunpack.c.l.b16 %v1251
        %v1260 = vunpack.c.l.b16 %v1252
        %v1261 = vpack.c.b16 %v1258, %v1257
        %v1262 = vpack.c.b16 %v1260, %v1259
        %v1266 = vsel %vm264, %v1240, 0
        %v1269 = vsel %vm264, %v1241, 0
        %v1272 = vsel %vm264, %v1242, 0
        %v1275 = vsel %vm264, %v1243, 0
        %v1278 = vsel %vm264, %v1244, 0
        %v1281 = vsel %vm264, %v1245, 0
        %v1284 = vsel %vm264, %v1246, 0
        %v1287 = vsel %vm264, %v1247, 0
        %1289 = vmatpush.bf16.msra.mxu0 0
        %1290 = vmatpush.bf16.msra.mxu0 0
        %1291 = vmatpush.bf16.msra.mxu0 0
        %1292 = vmatpush.bf16.msra.mxu0 0
        %1293 = vmatpush.bf16.msra.mxu0 0
        %1294 = vmatpush.bf16.msra.mxu0 0
        %1295 = vmatpush.bf16.msra.mxu0 %v1262
        %1296 = vmatpush.bf16.msra.mxu0 %v1261
        %1297 = vmatmul.bf16.gmra.mxu0 %v1266
        %v1298 = vpop.f32.mrf.mxu0
        %v1299 = vadd.f32 0.0, %v1298
        %v1300 = vpop.f32.mrf.mxu0
        %v1301 = vadd.f32 0.0, %v1300
        %1302 = vmatmul.bf16.gmra.mxu0 %v1269
        %v1303 = vpop.f32.mrf.mxu0
        %v1304 = vadd.f32 0.0, %v1303
        %v1305 = vpop.f32.mrf.mxu0
        %v1306 = vadd.f32 0.0, %v1305
        %1307 = vmatmul.bf16.gmra.mxu0 %v1272
        %v1308 = vpop.f32.mrf.mxu0
        %v1309 = vadd.f32 0.0, %v1308
        %v1310 = vpop.f32.mrf.mxu0
        %v1311 = vadd.f32 0.0, %v1310
        %1312 = vmatmul.bf16.gmra.mxu0 %v1275
        %v1313 = vpop.f32.mrf.mxu0
        %v1314 = vadd.f32 0.0, %v1313
        %v1315 = vpop.f32.mrf.mxu0
        %v1316 = vadd.f32 0.0, %v1315
        %1317 = vmatmul.bf16.gmra.mxu0 %v1278
        %v1318 = vpop.f32.mrf.mxu0
        %v1319 = vadd.f32 0.0, %v1318
        %v1320 = vpop.f32.mrf.mxu0
        %v1321 = vadd.f32 0.0, %v1320
        %1322 = vmatmul.bf16.gmra.mxu0 %v1281
        %v1323 = vpop.f32.mrf.mxu0
        %v1324 = vadd.f32 0.0, %v1323
        %v1325 = vpop.f32.mrf.mxu0
        %v1326 = vadd.f32 0.0, %v1325
        %1327 = vmatmul.bf16.gmra.mxu0 %v1284
        %v1328 = vpop.f32.mrf.mxu0
        %v1329 = vadd.f32 0.0, %v1328
        %v1330 = vpop.f32.mrf.mxu0
        %v1331 = vadd.f32 0.0, %v1330
        %1332 = vmatmul.bf16.gmra.mxu0 %v1287
        %v1333 = vpop.f32.mrf.mxu0
        %v1334 = vadd.f32 0.0, %v1333
        %v1335 = vpop.f32.mrf.mxu0
        %v1336 = vadd.f32 0.0, %v1335
        %1337 = vdwg.mxu0
        %v1342 = vunpack.c.l.b16 %v1219
        %v1343 = vunpack.c.l.b16 %v1220
        %v1344 = vunpack.c.l.b16 %v1221
        %v1345 = vunpack.c.l.b16 %v1222
        %v1346 = vpack.c.b16 %v1343, %v1342
        %v1347 = vpack.c.b16 %v1345, %v1344
        %v1351 = vsel %vm264, %v1211, 0
        %v1354 = vsel %vm264, %v1212, 0
        %v1357 = vsel %vm264, %v1213, 0
        %v1360 = vsel %vm264, %v1214, 0
        %v1363 = vsel %vm264, %v1215, 0
        %v1366 = vsel %vm264, %v1216, 0
        %v1369 = vsel %vm264, %v1217, 0
        %v1372 = vsel %vm264, %v1218, 0
        %1374 = vmatpush.bf16.msra.mxu0 0
        %1375 = vmatpush.bf16.msra.mxu0 0
        %1376 = vmatpush.bf16.msra.mxu0 0
        %1377 = vmatpush.bf16.msra.mxu0 0
        %1378 = vmatpush.bf16.msra.mxu0 0
        %1379 = vmatpush.bf16.msra.mxu0 0
        %1380 = vmatpush.bf16.msra.mxu0 %v1347
        %1381 = vmatpush.bf16.msra.mxu0 %v1346
        %1382 = vmatmul.bf16.gmra.mxu0 %v1351
        %v1383 = vpop.f32.mrf.mxu0
        %v1384 = vadd.f32 %v1299, %v1383
        %v1385 = vpop.f32.mrf.mxu0
        %v1386 = vadd.f32 %v1301, %v1385
        %1387 = vmatmul.bf16.gmra.mxu0 %v1354
        %v1388 = vpop.f32.mrf.mxu0
        %v1389 = vadd.f32 %v1304, %v1388
        %v1390 = vpop.f32.mrf.mxu0
        %v1391 = vadd.f32 %v1306, %v1390
        %1392 = vmatmul.bf16.gmra.mxu0 %v1357
        %v1393 = vpop.f32.mrf.mxu0
        %v1394 = vadd.f32 %v1309, %v1393
        %v1395 = vpop.f32.mrf.mxu0
        %v1396 = vadd.f32 %v1311, %v1395
        %1397 = vmatmul.bf16.gmra.mxu0 %v1360
        %v1398 = vpop.f32.mrf.mxu0
        %v1399 = vadd.f32 %v1314, %v1398
        %v1400 = vpop.f32.mrf.mxu0
        %v1401 = vadd.f32 %v1316, %v1400
        %1402 = vmatmul.bf16.gmra.mxu0 %v1363
        %v1403 = vpop.f32.mrf.mxu0
        %v1404 = vadd.f32 %v1319, %v1403
        %v1405 = vpop.f32.mrf.mxu0
        %v1406 = vadd.f32 %v1321, %v1405
        %1407 = vmatmul.bf16.gmra.mxu0 %v1366
        %v1408 = vpop.f32.mrf.mxu0
        %v1409 = vadd.f32 %v1324, %v1408
        %v1410 = vpop.f32.mrf.mxu0
        %v1411 = vadd.f32 %v1326, %v1410
        %1412 = vmatmul.bf16.gmra.mxu0 %v1369
        %v1413 = vpop.f32.mrf.mxu0
        %v1414 = vadd.f32 %v1329, %v1413
        %v1415 = vpop.f32.mrf.mxu0
        %v1416 = vadd.f32 %v1331, %v1415
        %1417 = vmatmul.bf16.gmra.mxu0 %v1372
        %v1418 = vpop.f32.mrf.mxu0
        %v1419 = vadd.f32 %v1334, %v1418
        %v1420 = vpop.f32.mrf.mxu0
        %v1421 = vadd.f32 %v1336, %v1420
        %1422 = vdwg.mxu0
        %v1423 = vld [vmem:[%s1194 + $0x8] sm:$0xff]
        %v1424 = vld [vmem:[%s1194 + $0x18] sm:$0xff]
        %v1425 = vld [vmem:[%s1194 + $0x28] sm:$0xff]
        %v1426 = vld [vmem:[%s1194 + $0x38] sm:$0xff]
        %v1427 = vld [vmem:[%s1194 + $0x48] sm:$0xff]
        %v1428 = vld [vmem:[%s1194 + $0x58] sm:$0xff]
        %v1429 = vld [vmem:[%s1194 + $0x68] sm:$0xff]
        %v1430 = vld [vmem:[%s1194 + $0x78] sm:$0xff]
        %v1431 = vld [vmem:[%s1194 + $0x98] sm:$0xff]
        %v1432 = vld [vmem:[%s1194 + $0xa8] sm:$0xff]
        %v1433 = vld [vmem:[%s1194 + $0xb8] sm:$0xff]
        %v1434 = vld [vmem:[%s1194 + $0xc8] sm:$0xff]
        %v1435 = vld [vmem:[%s1194 + $0xd8] sm:$0xff]
        %v1436 = vld [vmem:[%s1194 + $0xe8] sm:$0xff]
        %v1437 = vld [vmem:[%s1194 + $0xf8] sm:$0xff]
        %v1438 = vld [vmem:[%s1194 + $0x108] sm:$0xff]
        %v1439 = vpack.c.bf16 %v1424, %v1423
        %v1440 = vpack.c.bf16 %v1426, %v1425
        %v1441 = vpack.c.bf16 %v1428, %v1427
        %v1442 = vpack.c.bf16 %v1430, %v1429
        %v1443 = vpack.c.bf16 %v1432, %v1431
        %v1444 = vpack.c.bf16 %v1434, %v1433
        %v1445 = vpack.c.bf16 %v1436, %v1435
        %v1446 = vpack.c.bf16 %v1438, %v1437
        %s1447 = scalar_lea.vmem %s3, 32
        %v1448 = vld [vmem:[%s1447] sm:$0xf]
        %v1449 = vld [vmem:[%s1447 + $0x4] sm:$0xf]
        %v1450 = vld [vmem:[%s1447 + $0x8] sm:$0xf]
        %v1451 = vld [vmem:[%s1447 + $0xc] sm:$0xf]
        %v1456 = vunpack.c.l.b16 %v1448
        %v1457 = vunpack.c.l.b16 %v1449
        %v1458 = vunpack.c.l.b16 %v1450
        %v1459 = vunpack.c.l.b16 %v1451
        %v1460 = vpack.c.b16 %v1457, %v1456
        %v1461 = vpack.c.b16 %v1459, %v1458
        %v1465 = vsel %vm264, %v1439, 0
        %v1468 = vsel %vm264, %v1440, 0
        %v1471 = vsel %vm264, %v1441, 0
        %v1474 = vsel %vm264, %v1442, 0
        %v1477 = vsel %vm264, %v1443, 0
        %v1480 = vsel %vm264, %v1444, 0
        %v1483 = vsel %vm264, %v1445, 0
        %v1486 = vsel %vm264, %v1446, 0
        %1488 = vmatpush.bf16.msra.mxu0 0
        %1489 = vmatpush.bf16.msra.mxu0 0
        %1490 = vmatpush.bf16.msra.mxu0 0
        %1491 = vmatpush.bf16.msra.mxu0 0
        %1492 = vmatpush.bf16.msra.mxu0 0
        %1493 = vmatpush.bf16.msra.mxu0 0
        %1494 = vmatpush.bf16.msra.mxu0 %v1461
        %1495 = vmatpush.bf16.msra.mxu0 %v1460
        %1496 = vmatmul.bf16.gmra.mxu0 %v1465
        %v1497 = vpop.f32.mrf.mxu0
        %v1498 = vadd.f32 0.0, %v1497
        %v1499 = vpop.f32.mrf.mxu0
        %v1500 = vadd.f32 0.0, %v1499
        %1501 = vmatmul.bf16.gmra.mxu0 %v1468
        %v1502 = vpop.f32.mrf.mxu0
        %v1503 = vadd.f32 0.0, %v1502
        %v1504 = vpop.f32.mrf.mxu0
        %v1505 = vadd.f32 0.0, %v1504
        %1506 = vmatmul.bf16.gmra.mxu0 %v1471
        %v1507 = vpop.f32.mrf.mxu0
        %v1508 = vadd.f32 0.0, %v1507
        %v1509 = vpop.f32.mrf.mxu0
        %v1510 = vadd.f32 0.0, %v1509
        %1511 = vmatmul.bf16.gmra.mxu0 %v1474
        %v1512 = vpop.f32.mrf.mxu0
        %v1513 = vadd.f32 0.0, %v1512
        %v1514 = vpop.f32.mrf.mxu0
        %v1515 = vadd.f32 0.0, %v1514
        %1516 = vmatmul.bf16.gmra.mxu0 %v1477
        %v1517 = vpop.f32.mrf.mxu0
        %v1518 = vadd.f32 0.0, %v1517
        %v1519 = vpop.f32.mrf.mxu0
        %v1520 = vadd.f32 0.0, %v1519
        %1521 = vmatmul.bf16.gmra.mxu0 %v1480
        %v1522 = vpop.f32.mrf.mxu0
        %v1523 = vadd.f32 0.0, %v1522
        %v1524 = vpop.f32.mrf.mxu0
        %v1525 = vadd.f32 0.0, %v1524
        %1526 = vmatmul.bf16.gmra.mxu0 %v1483
        %v1527 = vpop.f32.mrf.mxu0
        %v1528 = vadd.f32 0.0, %v1527
        %v1529 = vpop.f32.mrf.mxu0
        %v1530 = vadd.f32 0.0, %v1529
        %1531 = vmatmul.bf16.gmra.mxu0 %v1486
        %v1532 = vpop.f32.mrf.mxu0
        %v1533 = vadd.f32 0.0, %v1532
        %v1534 = vpop.f32.mrf.mxu0
        %v1535 = vadd.f32 0.0, %v1534
        %1536 = vdwg.mxu0
        %v1537 = vadd.f32 %v1384, %v1498
        %v1538 = vadd.f32 %v1386, %v1500
        %v1539 = vadd.f32 %v1389, %v1503
        %v1540 = vadd.f32 %v1391, %v1505
        %v1541 = vadd.f32 %v1394, %v1508
        %v1542 = vadd.f32 %v1396, %v1510
        %v1543 = vadd.f32 %v1399, %v1513
        %v1544 = vadd.f32 %v1401, %v1515
        %v1545 = vadd.f32 %v1404, %v1518
        %v1546 = vadd.f32 %v1406, %v1520
        %v1547 = vadd.f32 %v1409, %v1523
        %v1548 = vadd.f32 %v1411, %v1525
        %v1549 = vadd.f32 %v1414, %v1528
        %v1550 = vadd.f32 %v1416, %v1530
        %v1551 = vadd.f32 %v1419, %v1533
        %v1552 = vadd.f32 %v1421, %v1535
        %s1553 = scalar_lea.vmem [#allocation2], 304
        %v1554 = vld [vmem:[%s1553 + $0x7] sm:$0xff]
        %v1555 = vld [vmem:[%s1553 + $0x17] sm:$0xff]
        %v1556 = vld [vmem:[%s1553 + $0x27] sm:$0xff]
        %v1557 = vld [vmem:[%s1553 + $0x37] sm:$0xff]
        %v1558 = vld [vmem:[%s1553 + $0x47] sm:$0xff]
        %v1559 = vld [vmem:[%s1553 + $0x57] sm:$0xff]
        %v1560 = vld [vmem:[%s1553 + $0x67] sm:$0xff]
        %v1561 = vld [vmem:[%s1553 + $0x77] sm:$0xff]
        %v1562 = vld [vmem:[%s1553 + $0x97] sm:$0xff]
        %v1563 = vld [vmem:[%s1553 + $0xa7] sm:$0xff]
        %v1564 = vld [vmem:[%s1553 + $0xb7] sm:$0xff]
        %v1565 = vld [vmem:[%s1553 + $0xc7] sm:$0xff]
        %v1566 = vld [vmem:[%s1553 + $0xd7] sm:$0xff]
        %v1567 = vld [vmem:[%s1553 + $0xe7] sm:$0xff]
        %v1568 = vld [vmem:[%s1553 + $0xf7] sm:$0xff]
        %v1569 = vld [vmem:[%s1553 + $0x107] sm:$0xff]
        %v1570 = vpack.c.bf16 %v1555, %v1554
        %v1571 = vpack.c.bf16 %v1557, %v1556
        %v1572 = vpack.c.bf16 %v1559, %v1558
        %v1573 = vpack.c.bf16 %v1561, %v1560
        %v1574 = vpack.c.bf16 %v1563, %v1562
        %v1575 = vpack.c.bf16 %v1565, %v1564
        %v1576 = vpack.c.bf16 %v1567, %v1566
        %v1577 = vpack.c.bf16 %v1569, %v1568
        %s1578 = scalar_lea.vmem %s3, 48
        %v1579 = vld [vmem:[%s1578] sm:$0xf]
        %v1580 = vld [vmem:[%s1578 + $0x4] sm:$0xf]
        %v1581 = vld [vmem:[%s1578 + $0x8] sm:$0xf]
        %v1582 = vld [vmem:[%s1578 + $0xc] sm:$0xf]
        %v1587 = vunpack.c.l.b16 %v1579
        %v1588 = vunpack.c.l.b16 %v1580
        %v1589 = vunpack.c.l.b16 %v1581
        %v1590 = vunpack.c.l.b16 %v1582
        %v1591 = vpack.c.b16 %v1588, %v1587
        %v1592 = vpack.c.b16 %v1590, %v1589
        %v1596 = vsel %vm264, %v1570, 0
        %v1599 = vsel %vm264, %v1571, 0
        %v1602 = vsel %vm264, %v1572, 0
        %v1605 = vsel %vm264, %v1573, 0
        %v1608 = vsel %vm264, %v1574, 0
        %v1611 = vsel %vm264, %v1575, 0
        %v1614 = vsel %vm264, %v1576, 0
        %v1617 = vsel %vm264, %v1577, 0
        %1619 = vmatpush.bf16.msra.mxu0 0
        %1620 = vmatpush.bf16.msra.mxu0 0
        %1621 = vmatpush.bf16.msra.mxu0 0
        %1622 = vmatpush.bf16.msra.mxu0 0
        %1623 = vmatpush.bf16.msra.mxu0 0
        %1624 = vmatpush.bf16.msra.mxu0 0
        %1625 = vmatpush.bf16.msra.mxu0 %v1592
        %1626 = vmatpush.bf16.msra.mxu0 %v1591
        %1627 = vmatmul.bf16.gmra.mxu0 %v1596
        %v1628 = vpop.f32.mrf.mxu0
        %v1629 = vadd.f32 0.0, %v1628
        %v1630 = vpop.f32.mrf.mxu0
        %v1631 = vadd.f32 0.0, %v1630
        %1632 = vmatmul.bf16.gmra.mxu0 %v1599
        %v1633 = vpop.f32.mrf.mxu0
        %v1634 = vadd.f32 0.0, %v1633
        %v1635 = vpop.f32.mrf.mxu0
        %v1636 = vadd.f32 0.0, %v1635
        %1637 = vmatmul.bf16.gmra.mxu0 %v1602
        %v1638 = vpop.f32.mrf.mxu0
        %v1639 = vadd.f32 0.0, %v1638
        %v1640 = vpop.f32.mrf.mxu0
        %v1641 = vadd.f32 0.0, %v1640
        %1642 = vmatmul.bf16.gmra.mxu0 %v1605
        %v1643 = vpop.f32.mrf.mxu0
        %v1644 = vadd.f32 0.0, %v1643
        %v1645 = vpop.f32.mrf.mxu0
        %v1646 = vadd.f32 0.0, %v1645
        %1647 = vmatmul.bf16.gmra.mxu0 %v1608
        %v1648 = vpop.f32.mrf.mxu0
        %v1649 = vadd.f32 0.0, %v1648
        %v1650 = vpop.f32.mrf.mxu0
        %v1651 = vadd.f32 0.0, %v1650
        %1652 = vmatmul.bf16.gmra.mxu0 %v1611
        %v1653 = vpop.f32.mrf.mxu0
        %v1654 = vadd.f32 0.0, %v1653
        %v1655 = vpop.f32.mrf.mxu0
        %v1656 = vadd.f32 0.0, %v1655
        %1657 = vmatmul.bf16.gmra.mxu0 %v1614
        %v1658 = vpop.f32.mrf.mxu0
        %v1659 = vadd.f32 0.0, %v1658
        %v1660 = vpop.f32.mrf.mxu0
        %v1661 = vadd.f32 0.0, %v1660
        %1662 = vmatmul.bf16.gmra.mxu0 %v1617
        %v1663 = vpop.f32.mrf.mxu0
        %v1664 = vadd.f32 0.0, %v1663
        %v1665 = vpop.f32.mrf.mxu0
        %v1666 = vadd.f32 0.0, %v1665
        %1667 = vdwg.mxu0
        %v1668 = vadd.f32 %v1537, %v1629
        %v1669 = vadd.f32 %v1538, %v1631
        %v1670 = vadd.f32 %v1539, %v1634
        %v1671 = vadd.f32 %v1540, %v1636
        %v1672 = vadd.f32 %v1541, %v1639
        %v1673 = vadd.f32 %v1542, %v1641
        %v1674 = vadd.f32 %v1543, %v1644
        %v1675 = vadd.f32 %v1544, %v1646
        %v1676 = vadd.f32 %v1545, %v1649
        %v1677 = vadd.f32 %v1546, %v1651
        %v1678 = vadd.f32 %v1547, %v1654
        %v1679 = vadd.f32 %v1548, %v1656
        %v1680 = vadd.f32 %v1549, %v1659
        %v1681 = vadd.f32 %v1550, %v1661
        %v1682 = vadd.f32 %v1551, %v1664
        %v1683 = vadd.f32 %v1552, %v1666
        %v1684 = vld [vmem:[%s936 + $0x8] sm:$0xff]
        %v1685 = vld [vmem:[%s936 + $0x18] sm:$0xff]
        %v1686 = vld [vmem:[%s936 + $0x28] sm:$0xff]
        %v1687 = vld [vmem:[%s936 + $0x38] sm:$0xff]
        %v1688 = vld [vmem:[%s936 + $0x48] sm:$0xff]
        %v1689 = vld [vmem:[%s936 + $0x58] sm:$0xff]
        %v1690 = vld [vmem:[%s936 + $0x68] sm:$0xff]
        %v1691 = vld [vmem:[%s936 + $0x78] sm:$0xff]
        %v1692 = vld [vmem:[%s936 + $0x98] sm:$0xff]
        %v1693 = vld [vmem:[%s936 + $0xa8] sm:$0xff]
        %v1694 = vld [vmem:[%s936 + $0xb8] sm:$0xff]
        %v1695 = vld [vmem:[%s936 + $0xc8] sm:$0xff]
        %v1696 = vld [vmem:[%s936 + $0xd8] sm:$0xff]
        %v1697 = vld [vmem:[%s936 + $0xe8] sm:$0xff]
        %v1698 = vld [vmem:[%s936 + $0xf8] sm:$0xff]
        %v1699 = vld [vmem:[%s936 + $0x108] sm:$0xff]
        %v1700 = vpack.c.bf16 %v1685, %v1684
        %v1701 = vpack.c.bf16 %v1687, %v1686
        %v1702 = vpack.c.bf16 %v1689, %v1688
        %v1703 = vpack.c.bf16 %v1691, %v1690
        %v1704 = vpack.c.bf16 %v1693, %v1692
        %v1705 = vpack.c.bf16 %v1695, %v1694
        %v1706 = vpack.c.bf16 %v1697, %v1696
        %v1707 = vpack.c.bf16 %v1699, %v1698
        %s1708 = scalar_lea.vmem %s3, 64
        %v1709 = vld [vmem:[%s1708] sm:$0xf]
        %v1710 = vld [vmem:[%s1708 + $0x4] sm:$0xf]
        %v1711 = vld [vmem:[%s1708 + $0x8] sm:$0xf]
        %v1712 = vld [vmem:[%s1708 + $0xc] sm:$0xf]
        %v1717 = vunpack.c.l.b16 %v1709
        %v1718 = vunpack.c.l.b16 %v1710
        %v1719 = vunpack.c.l.b16 %v1711
        %v1720 = vunpack.c.l.b16 %v1712
        %v1721 = vpack.c.b16 %v1718, %v1717
        %v1722 = vpack.c.b16 %v1720, %v1719
        %v1726 = vsel %vm264, %v1700, 0
        %v1729 = vsel %vm264, %v1701, 0
        %v1732 = vsel %vm264, %v1702, 0
        %v1735 = vsel %vm264, %v1703, 0
        %v1738 = vsel %vm264, %v1704, 0
        %v1741 = vsel %vm264, %v1705, 0
        %v1744 = vsel %vm264, %v1706, 0
        %v1747 = vsel %vm264, %v1707, 0
        %1749 = vmatpush.bf16.msra.mxu0 0
        %1750 = vmatpush.bf16.msra.mxu0 0
        %1751 = vmatpush.bf16.msra.mxu0 0
        %1752 = vmatpush.bf16.msra.mxu0 0
        %1753 = vmatpush.bf16.msra.mxu0 0
        %1754 = vmatpush.bf16.msra.mxu0 0
        %1755 = vmatpush.bf16.msra.mxu0 %v1722
        %1756 = vmatpush.bf16.msra.mxu0 %v1721
        %1757 = vmatmul.bf16.gmra.mxu0 %v1726
        %v1758 = vpop.f32.mrf.mxu0
        %v1759 = vadd.f32 0.0, %v1758
        %v1760 = vpop.f32.mrf.mxu0
        %v1761 = vadd.f32 0.0, %v1760
        %1762 = vmatmul.bf16.gmra.mxu0 %v1729
        %v1763 = vpop.f32.mrf.mxu0
        %v1764 = vadd.f32 0.0, %v1763
        %v1765 = vpop.f32.mrf.mxu0
        %v1766 = vadd.f32 0.0, %v1765
        %1767 = vmatmul.bf16.gmra.mxu0 %v1732
        %v1768 = vpop.f32.mrf.mxu0
        %v1769 = vadd.f32 0.0, %v1768
        %v1770 = vpop.f32.mrf.mxu0
        %v1771 = vadd.f32 0.0, %v1770
        %1772 = vmatmul.bf16.gmra.mxu0 %v1735
        %v1773 = vpop.f32.mrf.mxu0
        %v1774 = vadd.f32 0.0, %v1773
        %v1775 = vpop.f32.mrf.mxu0
        %v1776 = vadd.f32 0.0, %v1775
        %1777 = vmatmul.bf16.gmra.mxu0 %v1738
        %v1778 = vpop.f32.mrf.mxu0
        %v1779 = vadd.f32 0.0, %v1778
        %v1780 = vpop.f32.mrf.mxu0
        %v1781 = vadd.f32 0.0, %v1780
        %1782 = vmatmul.bf16.gmra.mxu0 %v1741
        %v1783 = vpop.f32.mrf.mxu0
        %v1784 = vadd.f32 0.0, %v1783
        %v1785 = vpop.f32.mrf.mxu0
        %v1786 = vadd.f32 0.0, %v1785
        %1787 = vmatmul.bf16.gmra.mxu0 %v1744
        %v1788 = vpop.f32.mrf.mxu0
        %v1789 = vadd.f32 0.0, %v1788
        %v1790 = vpop.f32.mrf.mxu0
        %v1791 = vadd.f32 0.0, %v1790
        %1792 = vmatmul.bf16.gmra.mxu0 %v1747
        %v1793 = vpop.f32.mrf.mxu0
        %v1794 = vadd.f32 0.0, %v1793
        %v1795 = vpop.f32.mrf.mxu0
        %v1796 = vadd.f32 0.0, %v1795
        %1797 = vdwg.mxu0
        %v1798 = vadd.f32 %v1668, %v1759
        %v1799 = vadd.f32 %v1669, %v1761
        %v1800 = vadd.f32 %v1670, %v1764
        %v1801 = vadd.f32 %v1671, %v1766
        %v1802 = vadd.f32 %v1672, %v1769
        %v1803 = vadd.f32 %v1673, %v1771
        %v1804 = vadd.f32 %v1674, %v1774
        %v1805 = vadd.f32 %v1675, %v1776
        %v1806 = vadd.f32 %v1676, %v1779
        %v1807 = vadd.f32 %v1677, %v1781
        %v1808 = vadd.f32 %v1678, %v1784
        %v1809 = vadd.f32 %v1679, %v1786
        %v1810 = vadd.f32 %v1680, %v1789
        %v1811 = vadd.f32 %v1681, %v1791
        %v1812 = vadd.f32 %v1682, %v1794
        %v1813 = vadd.f32 %v1683, %v1796
        %v1814 = vld [vmem:[%s1553 + $0x8] sm:$0xff]
        %v1815 = vld [vmem:[%s1553 + $0x18] sm:$0xff]
        %v1816 = vld [vmem:[%s1553 + $0x28] sm:$0xff]
        %v1817 = vld [vmem:[%s1553 + $0x38] sm:$0xff]
        %v1818 = vld [vmem:[%s1553 + $0x48] sm:$0xff]
        %v1819 = vld [vmem:[%s1553 + $0x58] sm:$0xff]
        %v1820 = vld [vmem:[%s1553 + $0x68] sm:$0xff]
        %v1821 = vld [vmem:[%s1553 + $0x78] sm:$0xff]
        %v1822 = vld [vmem:[%s1553 + $0x98] sm:$0xff]
        %v1823 = vld [vmem:[%s1553 + $0xa8] sm:$0xff]
        %v1824 = vld [vmem:[%s1553 + $0xb8] sm:$0xff]
        %v1825 = vld [vmem:[%s1553 + $0xc8] sm:$0xff]
        %v1826 = vld [vmem:[%s1553 + $0xd8] sm:$0xff]
        %v1827 = vld [vmem:[%s1553 + $0xe8] sm:$0xff]
        %v1828 = vld [vmem:[%s1553 + $0xf8] sm:$0xff]
        %v1829 = vld [vmem:[%s1553 + $0x108] sm:$0xff]
        %v1830 = vpack.c.bf16 %v1815, %v1814
        %v1831 = vpack.c.bf16 %v1817, %v1816
        %v1832 = vpack.c.bf16 %v1819, %v1818
        %v1833 = vpack.c.bf16 %v1821, %v1820
        %v1834 = vpack.c.bf16 %v1823, %v1822
        %v1835 = vpack.c.bf16 %v1825, %v1824
        %v1836 = vpack.c.bf16 %v1827, %v1826
        %v1837 = vpack.c.bf16 %v1829, %v1828
        %s1838 = scalar_lea.vmem %s3, 80
        %v1839 = vld [vmem:[%s1838] sm:$0xf]
        %v1840 = vld [vmem:[%s1838 + $0x4] sm:$0xf]
        %v1841 = vld [vmem:[%s1838 + $0x8] sm:$0xf]
        %v1842 = vld [vmem:[%s1838 + $0xc] sm:$0xf]
        %v1847 = vunpack.c.l.b16 %v1839
        %v1848 = vunpack.c.l.b16 %v1840
        %v1849 = vunpack.c.l.b16 %v1841
        %v1850 = vunpack.c.l.b16 %v1842
        %v1851 = vpack.c.b16 %v1848, %v1847
        %v1852 = vpack.c.b16 %v1850, %v1849
        %v1856 = vsel %vm264, %v1830, 0
        %v1859 = vsel %vm264, %v1831, 0
        %v1862 = vsel %vm264, %v1832, 0
        %v1865 = vsel %vm264, %v1833, 0
        %v1868 = vsel %vm264, %v1834, 0
        %v1871 = vsel %vm264, %v1835, 0
        %v1874 = vsel %vm264, %v1836, 0
        %v1877 = vsel %vm264, %v1837, 0
        %1879 = vmatpush.bf16.msra.mxu0 0
        %1880 = vmatpush.bf16.msra.mxu0 0
        %1881 = vmatpush.bf16.msra.mxu0 0
        %1882 = vmatpush.bf16.msra.mxu0 0
        %1883 = vmatpush.bf16.msra.mxu0 0
        %1884 = vmatpush.bf16.msra.mxu0 0
        %1885 = vmatpush.bf16.msra.mxu0 %v1852
        %1886 = vmatpush.bf16.msra.mxu0 %v1851
        %1887 = vmatmul.bf16.gmra.mxu0 %v1856
        %v1888 = vpop.f32.mrf.mxu0
        %v1889 = vadd.f32 0.0, %v1888
        %v1890 = vpop.f32.mrf.mxu0
        %v1891 = vadd.f32 0.0, %v1890
        %1892 = vmatmul.bf16.gmra.mxu0 %v1859
        %v1893 = vpop.f32.mrf.mxu0
        %v1894 = vadd.f32 0.0, %v1893
        %v1895 = vpop.f32.mrf.mxu0
        %v1896 = vadd.f32 0.0, %v1895
        %1897 = vmatmul.bf16.gmra.mxu0 %v1862
        %v1898 = vpop.f32.mrf.mxu0
        %v1899 = vadd.f32 0.0, %v1898
        %v1900 = vpop.f32.mrf.mxu0
        %v1901 = vadd.f32 0.0, %v1900
        %1902 = vmatmul.bf16.gmra.mxu0 %v1865
        %v1903 = vpop.f32.mrf.mxu0
        %v1904 = vadd.f32 0.0, %v1903
        %v1905 = vpop.f32.mrf.mxu0
        %v1906 = vadd.f32 0.0, %v1905
        %1907 = vmatmul.bf16.gmra.mxu0 %v1868
        %v1908 = vpop.f32.mrf.mxu0
        %v1909 = vadd.f32 0.0, %v1908
        %v1910 = vpop.f32.mrf.mxu0
        %v1911 = vadd.f32 0.0, %v1910
        %1912 = vmatmul.bf16.gmra.mxu0 %v1871
        %v1913 = vpop.f32.mrf.mxu0
        %v1914 = vadd.f32 0.0, %v1913
        %v1915 = vpop.f32.mrf.mxu0
        %v1916 = vadd.f32 0.0, %v1915
        %1917 = vmatmul.bf16.gmra.mxu0 %v1874
        %v1918 = vpop.f32.mrf.mxu0
        %v1919 = vadd.f32 0.0, %v1918
        %v1920 = vpop.f32.mrf.mxu0
        %v1921 = vadd.f32 0.0, %v1920
        %1922 = vmatmul.bf16.gmra.mxu0 %v1877
        %v1923 = vpop.f32.mrf.mxu0
        %v1924 = vadd.f32 0.0, %v1923
        %v1925 = vpop.f32.mrf.mxu0
        %v1926 = vadd.f32 0.0, %v1925
        %1927 = vdwg.mxu0
        %v1928 = vadd.f32 %v1798, %v1889
        %v1929 = vadd.f32 %v1799, %v1891
        %v1930 = vadd.f32 %v1800, %v1894
        %v1931 = vadd.f32 %v1801, %v1896
        %v1932 = vadd.f32 %v1802, %v1899
        %v1933 = vadd.f32 %v1803, %v1901
        %v1934 = vadd.f32 %v1804, %v1904
        %v1935 = vadd.f32 %v1805, %v1906
        %v1936 = vadd.f32 %v1806, %v1909
        %v1937 = vadd.f32 %v1807, %v1911
        %v1938 = vadd.f32 %v1808, %v1914
        %v1939 = vadd.f32 %v1809, %v1916
        %v1940 = vadd.f32 %v1810, %v1919
        %v1941 = vadd.f32 %v1811, %v1921
        %v1942 = vadd.f32 %v1812, %v1924
        %v1943 = vadd.f32 %v1813, %v1926
        %s1944 = scalar_lea.vmem [#allocation2], 880
        %v1945 = vld [vmem:[%s1944 + $0x7] sm:$0xff]
        %v1946 = vld [vmem:[%s1944 + $0x17] sm:$0xff]
        %v1947 = vld [vmem:[%s1944 + $0x27] sm:$0xff]
        %v1948 = vld [vmem:[%s1944 + $0x37] sm:$0xff]
        %v1949 = vld [vmem:[%s1944 + $0x47] sm:$0xff]
        %v1950 = vld [vmem:[%s1944 + $0x57] sm:$0xff]
        %v1951 = vld [vmem:[%s1944 + $0x67] sm:$0xff]
        %v1952 = vld [vmem:[%s1944 + $0x77] sm:$0xff]
        %v1953 = vld [vmem:[%s1944 + $0x97] sm:$0xff]
        %v1954 = vld [vmem:[%s1944 + $0xa7] sm:$0xff]
        %v1955 = vld [vmem:[%s1944 + $0xb7] sm:$0xff]
        %v1956 = vld [vmem:[%s1944 + $0xc7] sm:$0xff]
        %v1957 = vld [vmem:[%s1944 + $0xd7] sm:$0xff]
        %v1958 = vld [vmem:[%s1944 + $0xe7] sm:$0xff]
        %v1959 = vld [vmem:[%s1944 + $0xf7] sm:$0xff]
        %v1960 = vld [vmem:[%s1944 + $0x107] sm:$0xff]
        %v1961 = vpack.c.bf16 %v1946, %v1945
        %v1962 = vpack.c.bf16 %v1948, %v1947
        %v1963 = vpack.c.bf16 %v1950, %v1949
        %v1964 = vpack.c.bf16 %v1952, %v1951
        %v1965 = vpack.c.bf16 %v1954, %v1953
        %v1966 = vpack.c.bf16 %v1956, %v1955
        %v1967 = vpack.c.bf16 %v1958, %v1957
        %v1968 = vpack.c.bf16 %v1960, %v1959
        %s1969 = scalar_lea.vmem %s3, 96
        %v1970 = vld [vmem:[%s1969] sm:$0xf]
        %v1971 = vld [vmem:[%s1969 + $0x4] sm:$0xf]
        %v1972 = vld [vmem:[%s1969 + $0x8] sm:$0xf]
        %v1973 = vld [vmem:[%s1969 + $0xc] sm:$0xf]
        %v1978 = vunpack.c.l.b16 %v1970
        %v1979 = vunpack.c.l.b16 %v1971
        %v1980 = vunpack.c.l.b16 %v1972
        %v1981 = vunpack.c.l.b16 %v1973
        %v1982 = vpack.c.b16 %v1979, %v1978
        %v1983 = vpack.c.b16 %v1981, %v1980
        %v1987 = vsel %vm264, %v1961, 0
        %v1990 = vsel %vm264, %v1962, 0
        %v1993 = vsel %vm264, %v1963, 0
        %v1996 = vsel %vm264, %v1964, 0
        %v1999 = vsel %vm264, %v1965, 0
        %v2002 = vsel %vm264, %v1966, 0
        %v2005 = vsel %vm264, %v1967, 0
        %v2008 = vsel %vm264, %v1968, 0
        %2010 = vmatpush.bf16.msra.mxu0 0
        %2011 = vmatpush.bf16.msra.mxu0 0
        %2012 = vmatpush.bf16.msra.mxu0 0
        %2013 = vmatpush.bf16.msra.mxu0 0
        %2014 = vmatpush.bf16.msra.mxu0 0
        %2015 = vmatpush.bf16.msra.mxu0 0
        %2016 = vmatpush.bf16.msra.mxu0 %v1983
        %2017 = vmatpush.bf16.msra.mxu0 %v1982
        %2018 = vmatmul.bf16.gmra.mxu0 %v1987
        %v2019 = vpop.f32.mrf.mxu0
        %v2020 = vadd.f32 0.0, %v2019
        %v2021 = vpop.f32.mrf.mxu0
        %v2022 = vadd.f32 0.0, %v2021
        %2023 = vmatmul.bf16.gmra.mxu0 %v1990
        %v2024 = vpop.f32.mrf.mxu0
        %v2025 = vadd.f32 0.0, %v2024
        %v2026 = vpop.f32.mrf.mxu0
        %v2027 = vadd.f32 0.0, %v2026
        %2028 = vmatmul.bf16.gmra.mxu0 %v1993
        %v2029 = vpop.f32.mrf.mxu0
        %v2030 = vadd.f32 0.0, %v2029
        %v2031 = vpop.f32.mrf.mxu0
        %v2032 = vadd.f32 0.0, %v2031
        %2033 = vmatmul.bf16.gmra.mxu0 %v1996
        %v2034 = vpop.f32.mrf.mxu0
        %v2035 = vadd.f32 0.0, %v2034
        %v2036 = vpop.f32.mrf.mxu0
        %v2037 = vadd.f32 0.0, %v2036
        %2038 = vmatmul.bf16.gmra.mxu0 %v1999
        %v2039 = vpop.f32.mrf.mxu0
        %v2040 = vadd.f32 0.0, %v2039
        %v2041 = vpop.f32.mrf.mxu0
        %v2042 = vadd.f32 0.0, %v2041
        %2043 = vmatmul.bf16.gmra.mxu0 %v2002
        %v2044 = vpop.f32.mrf.mxu0
        %v2045 = vadd.f32 0.0, %v2044
        %v2046 = vpop.f32.mrf.mxu0
        %v2047 = vadd.f32 0.0, %v2046
        %2048 = vmatmul.bf16.gmra.mxu0 %v2005
        %v2049 = vpop.f32.mrf.mxu0
        %v2050 = vadd.f32 0.0, %v2049
        %v2051 = vpop.f32.mrf.mxu0
        %v2052 = vadd.f32 0.0, %v2051
        %2053 = vmatmul.bf16.gmra.mxu0 %v2008
        %v2054 = vpop.f32.mrf.mxu0
        %v2055 = vadd.f32 0.0, %v2054
        %v2056 = vpop.f32.mrf.mxu0
        %v2057 = vadd.f32 0.0, %v2056
        %2058 = vdwg.mxu0
        %v2059 = vadd.f32 %v1928, %v2020
        %v2060 = vadd.f32 %v1929, %v2022
        %v2061 = vadd.f32 %v1930, %v2025
        %v2062 = vadd.f32 %v1931, %v2027
        %v2063 = vadd.f32 %v1932, %v2030
        %v2064 = vadd.f32 %v1933, %v2032
        %v2065 = vadd.f32 %v1934, %v2035
        %v2066 = vadd.f32 %v1935, %v2037
        %v2067 = vadd.f32 %v1936, %v2040
        %v2068 = vadd.f32 %v1937, %v2042
        %v2069 = vadd.f32 %v1938, %v2045
        %v2070 = vadd.f32 %v1939, %v2047
        %v2071 = vadd.f32 %v1940, %v2050
        %v2072 = vadd.f32 %v1941, %v2052
        %v2073 = vadd.f32 %v1942, %v2055
        %v2074 = vadd.f32 %v1943, %v2057
        %s2075 = scalar_lea.vmem [#allocation2], 592
        %v2076 = vld [vmem:[%s2075 + $0x8] sm:$0xff]
        %v2077 = vld [vmem:[%s2075 + $0x18] sm:$0xff]
        %v2078 = vld [vmem:[%s2075 + $0x28] sm:$0xff]
        %v2079 = vld [vmem:[%s2075 + $0x38] sm:$0xff]
        %v2080 = vld [vmem:[%s2075 + $0x48] sm:$0xff]
        %v2081 = vld [vmem:[%s2075 + $0x58] sm:$0xff]
        %v2082 = vld [vmem:[%s2075 + $0x68] sm:$0xff]
        %v2083 = vld [vmem:[%s2075 + $0x78] sm:$0xff]
        %v2084 = vld [vmem:[%s2075 + $0x98] sm:$0xff]
        %v2085 = vld [vmem:[%s2075 + $0xa8] sm:$0xff]
        %v2086 = vld [vmem:[%s2075 + $0xb8] sm:$0xff]
        %v2087 = vld [vmem:[%s2075 + $0xc8] sm:$0xff]
        %v2088 = vld [vmem:[%s2075 + $0xd8] sm:$0xff]
        %v2089 = vld [vmem:[%s2075 + $0xe8] sm:$0xff]
        %v2090 = vld [vmem:[%s2075 + $0xf8] sm:$0xff]
        %v2091 = vld [vmem:[%s2075 + $0x108] sm:$0xff]
        %v2092 = vpack.c.bf16 %v2077, %v2076
        %v2093 = vpack.c.bf16 %v2079, %v2078
        %v2094 = vpack.c.bf16 %v2081, %v2080
        %v2095 = vpack.c.bf16 %v2083, %v2082
        %v2096 = vpack.c.bf16 %v2085, %v2084
        %v2097 = vpack.c.bf16 %v2087, %v2086
        %v2098 = vpack.c.bf16 %v2089, %v2088
        %v2099 = vpack.c.bf16 %v2091, %v2090
        %s2100 = scalar_lea.vmem %s3, 112
        %v2101 = vld [vmem:[%s2100] sm:$0xf]
        %v2102 = vld [vmem:[%s2100 + $0x4] sm:$0xf]
        %v2103 = vld [vmem:[%s2100 + $0x8] sm:$0xf]
        %v2104 = vld [vmem:[%s2100 + $0xc] sm:$0xf]
        %v2109 = vunpack.c.l.b16 %v2101
        %v2110 = vunpack.c.l.b16 %v2102
        %v2111 = vunpack.c.l.b16 %v2103
        %v2112 = vunpack.c.l.b16 %v2104
        %v2113 = vpack.c.b16 %v2110, %v2109
        %v2114 = vpack.c.b16 %v2112, %v2111
        %v2118 = vsel %vm264, %v2092, 0
        %v2121 = vsel %vm264, %v2093, 0
        %v2124 = vsel %vm264, %v2094, 0
        %v2127 = vsel %vm264, %v2095, 0
        %v2130 = vsel %vm264, %v2096, 0
        %v2133 = vsel %vm264, %v2097, 0
        %v2136 = vsel %vm264, %v2098, 0
        %v2139 = vsel %vm264, %v2099, 0
        %2141 = vmatpush.bf16.msra.mxu0 0
        %2142 = vmatpush.bf16.msra.mxu0 0
        %2143 = vmatpush.bf16.msra.mxu0 0
        %2144 = vmatpush.bf16.msra.mxu0 0
        %2145 = vmatpush.bf16.msra.mxu0 0
        %2146 = vmatpush.bf16.msra.mxu0 0
        %2147 = vmatpush.bf16.msra.mxu0 %v2114
        %2148 = vmatpush.bf16.msra.mxu0 %v2113
        %2149 = vmatmul.bf16.gmra.mxu0 %v2118
        %v2150 = vpop.f32.mrf.mxu0
        %v2151 = vadd.f32 0.0, %v2150
        %v2152 = vpop.f32.mrf.mxu0
        %v2153 = vadd.f32 0.0, %v2152
        %2154 = vmatmul.bf16.gmra.mxu0 %v2121
        %v2155 = vpop.f32.mrf.mxu0
        %v2156 = vadd.f32 0.0, %v2155
        %v2157 = vpop.f32.mrf.mxu0
        %v2158 = vadd.f32 0.0, %v2157
        %2159 = vmatmul.bf16.gmra.mxu0 %v2124
        %v2160 = vpop.f32.mrf.mxu0
        %v2161 = vadd.f32 0.0, %v2160
        %v2162 = vpop.f32.mrf.mxu0
        %v2163 = vadd.f32 0.0, %v2162
        %2164 = vmatmul.bf16.gmra.mxu0 %v2127
        %v2165 = vpop.f32.mrf.mxu0
        %v2166 = vadd.f32 0.0, %v2165
        %v2167 = vpop.f32.mrf.mxu0
        %v2168 = vadd.f32 0.0, %v2167
        %2169 = vmatmul.bf16.gmra.mxu0 %v2130
        %v2170 = vpop.f32.mrf.mxu0
        %v2171 = vadd.f32 0.0, %v2170
        %v2172 = vpop.f32.mrf.mxu0
        %v2173 = vadd.f32 0.0, %v2172
        %2174 = vmatmul.bf16.gmra.mxu0 %v2133
        %v2175 = vpop.f32.mrf.mxu0
        %v2176 = vadd.f32 0.0, %v2175
        %v2177 = vpop.f32.mrf.mxu0
        %v2178 = vadd.f32 0.0, %v2177
        %2179 = vmatmul.bf16.gmra.mxu0 %v2136
        %v2180 = vpop.f32.mrf.mxu0
        %v2181 = vadd.f32 0.0, %v2180
        %v2182 = vpop.f32.mrf.mxu0
        %v2183 = vadd.f32 0.0, %v2182
        %2184 = vmatmul.bf16.gmra.mxu0 %v2139
        %v2185 = vpop.f32.mrf.mxu0
        %v2186 = vadd.f32 0.0, %v2185
        %v2187 = vpop.f32.mrf.mxu0
        %v2188 = vadd.f32 0.0, %v2187
        %2189 = vdwg.mxu0
        %v2190 = vadd.f32 %v2059, %v2151
        %v2191 = vadd.f32 %v2060, %v2153
        %v2192 = vadd.f32 %v2061, %v2156
        %v2193 = vadd.f32 %v2062, %v2158
        %v2194 = vadd.f32 %v2063, %v2161
        %v2195 = vadd.f32 %v2064, %v2163
        %v2196 = vadd.f32 %v2065, %v2166
        %v2197 = vadd.f32 %v2066, %v2168
        %v2198 = vadd.f32 %v2067, %v2171
        %v2199 = vadd.f32 %v2068, %v2173
        %v2200 = vadd.f32 %v2069, %v2176
        %v2201 = vadd.f32 %v2070, %v2178
        %v2202 = vadd.f32 %v2071, %v2181
        %v2203 = vadd.f32 %v2072, %v2183
        %v2204 = vadd.f32 %v2073, %v2186
        %v2205 = vadd.f32 %v2074, %v2188
        %v2206 = vld [vmem:[%s1944 + $0x8] sm:$0xff]
        %v2207 = vld [vmem:[%s1944 + $0x18] sm:$0xff]
        %v2208 = vld [vmem:[%s1944 + $0x28] sm:$0xff]
        %v2209 = vld [vmem:[%s1944 + $0x38] sm:$0xff]
        %v2210 = vld [vmem:[%s1944 + $0x48] sm:$0xff]
        %v2211 = vld [vmem:[%s1944 + $0x58] sm:$0xff]
        %v2212 = vld [vmem:[%s1944 + $0x68] sm:$0xff]
        %v2213 = vld [vmem:[%s1944 + $0x78] sm:$0xff]
        %v2214 = vld [vmem:[%s1944 + $0x98] sm:$0xff]
        %v2215 = vld [vmem:[%s1944 + $0xa8] sm:$0xff]
        %v2216 = vld [vmem:[%s1944 + $0xb8] sm:$0xff]
        %v2217 = vld [vmem:[%s1944 + $0xc8] sm:$0xff]
        %v2218 = vld [vmem:[%s1944 + $0xd8] sm:$0xff]
        %v2219 = vld [vmem:[%s1944 + $0xe8] sm:$0xff]
        %v2220 = vld [vmem:[%s1944 + $0xf8] sm:$0xff]
        %v2221 = vld [vmem:[%s1944 + $0x108] sm:$0xff]
        %v2222 = vpack.c.bf16 %v2207, %v2206
        %v2223 = vpack.c.bf16 %v2209, %v2208
        %v2224 = vpack.c.bf16 %v2211, %v2210
        %v2225 = vpack.c.bf16 %v2213, %v2212
        %v2226 = vpack.c.bf16 %v2215, %v2214
        %v2227 = vpack.c.bf16 %v2217, %v2216
        %v2228 = vpack.c.bf16 %v2219, %v2218
        %v2229 = vpack.c.bf16 %v2221, %v2220
        %s2230 = scalar_lea.vmem %s3, 128
        %v2231 = vld [vmem:[%s2230] sm:$0xf]
        %v2232 = vld [vmem:[%s2230 + $0x4] sm:$0xf]
        %v2233 = vld [vmem:[%s2230 + $0x8] sm:$0xf]
        %v2234 = vld [vmem:[%s2230 + $0xc] sm:$0xf]
        %v2239 = vunpack.c.l.b16 %v2231
        %v2240 = vunpack.c.l.b16 %v2232
        %v2241 = vunpack.c.l.b16 %v2233
        %v2242 = vunpack.c.l.b16 %v2234
        %v2243 = vpack.c.b16 %v2240, %v2239
        %v2244 = vpack.c.b16 %v2242, %v2241
        %v2248 = vsel %vm264, %v2222, 0
        %v2251 = vsel %vm264, %v2223, 0
        %v2254 = vsel %vm264, %v2224, 0
        %v2257 = vsel %vm264, %v2225, 0
        %v2260 = vsel %vm264, %v2226, 0
        %v2263 = vsel %vm264, %v2227, 0
        %v2266 = vsel %vm264, %v2228, 0
        %v2269 = vsel %vm264, %v2229, 0
        %2271 = vmatpush.bf16.msra.mxu0 0
        %2272 = vmatpush.bf16.msra.mxu0 0
        %2273 = vmatpush.bf16.msra.mxu0 0
        %2274 = vmatpush.bf16.msra.mxu0 0
        %2275 = vmatpush.bf16.msra.mxu0 0
        %2276 = vmatpush.bf16.msra.mxu0 0
        %2277 = vmatpush.bf16.msra.mxu0 %v2244
        %2278 = vmatpush.bf16.msra.mxu0 %v2243
        %2279 = vmatmul.bf16.gmra.mxu0 %v2248
        %v2280 = vpop.f32.mrf.mxu0
        %v2281 = vadd.f32 0.0, %v2280
        %v2282 = vpop.f32.mrf.mxu0
        %v2283 = vadd.f32 0.0, %v2282
        %2284 = vmatmul.bf16.gmra.mxu0 %v2251
        %v2285 = vpop.f32.mrf.mxu0
        %v2286 = vadd.f32 0.0, %v2285
        %v2287 = vpop.f32.mrf.mxu0
        %v2288 = vadd.f32 0.0, %v2287
        %2289 = vmatmul.bf16.gmra.mxu0 %v2254
        %v2290 = vpop.f32.mrf.mxu0
        %v2291 = vadd.f32 0.0, %v2290
        %v2292 = vpop.f32.mrf.mxu0
        %v2293 = vadd.f32 0.0, %v2292
        %2294 = vmatmul.bf16.gmra.mxu0 %v2257
        %v2295 = vpop.f32.mrf.mxu0
        %v2296 = vadd.f32 0.0, %v2295
        %v2297 = vpop.f32.mrf.mxu0
        %v2298 = vadd.f32 0.0, %v2297
        %2299 = vmatmul.bf16.gmra.mxu0 %v2260
        %v2300 = vpop.f32.mrf.mxu0
        %v2301 = vadd.f32 0.0, %v2300
        %v2302 = vpop.f32.mrf.mxu0
        %v2303 = vadd.f32 0.0, %v2302
        %2304 = vmatmul.bf16.gmra.mxu0 %v2263
        %v2305 = vpop.f32.mrf.mxu0
        %v2306 = vadd.f32 0.0, %v2305
        %v2307 = vpop.f32.mrf.mxu0
        %v2308 = vadd.f32 0.0, %v2307
        %2309 = vmatmul.bf16.gmra.mxu0 %v2266
        %v2310 = vpop.f32.mrf.mxu0
        %v2311 = vadd.f32 0.0, %v2310
        %v2312 = vpop.f32.mrf.mxu0
        %v2313 = vadd.f32 0.0, %v2312
        %2314 = vmatmul.bf16.gmra.mxu0 %v2269
        %v2315 = vpop.f32.mrf.mxu0
        %v2316 = vadd.f32 0.0, %v2315
        %v2317 = vpop.f32.mrf.mxu0
        %v2318 = vadd.f32 0.0, %v2317
        %2319 = vdwg.mxu0
        %v2320 = vadd.f32 %v2190, %v2281
        %v2321 = vadd.f32 %v2191, %v2283
        %v2322 = vadd.f32 %v2192, %v2286
        %v2323 = vadd.f32 %v2193, %v2288
        %v2324 = vadd.f32 %v2194, %v2291
        %v2325 = vadd.f32 %v2195, %v2293
        %v2326 = vadd.f32 %v2196, %v2296
        %v2327 = vadd.f32 %v2197, %v2298
        %v2328 = vadd.f32 %v2198, %v2301
        %v2329 = vadd.f32 %v2199, %v2303
        %v2330 = vadd.f32 %v2200, %v2306
        %v2331 = vadd.f32 %v2201, %v2308
        %v2332 = vadd.f32 %v2202, %v2311
        %v2333 = vadd.f32 %v2203, %v2313
        %v2334 = vadd.f32 %v2204, %v2316
        %v2335 = vadd.f32 %v2205, %v2318
        %v2336 = vld [vmem:[%s4] sm:$0x1]
        %v2338 = vperm.slane %v2336, 0
        %v2340 = vadd.f32 %v2320, %v2338
        %v2341 = vadd.f32 %v2321, %v2338
        %v2342 = vadd.f32 %v2322, %v2338
        %v2343 = vadd.f32 %v2323, %v2338
        %v2344 = vadd.f32 %v2324, %v2338
        %v2345 = vadd.f32 %v2325, %v2338
        %v2346 = vadd.f32 %v2326, %v2338
        %v2347 = vadd.f32 %v2327, %v2338
        %v2348 = vadd.f32 %v2328, %v2338
        %v2349 = vadd.f32 %v2329, %v2338
        %v2350 = vadd.f32 %v2330, %v2338
        %v2351 = vadd.f32 %v2331, %v2338
        %v2352 = vadd.f32 %v2332, %v2338
        %v2353 = vadd.f32 %v2333, %v2338
        %v2354 = vadd.f32 %v2334, %v2338
        %v2355 = vadd.f32 %v2335, %v2338
        %v2356 = vmax.f32 %v2340, 0.0
        %v2357 = vmax.f32 %v2341, 0.0
        %v2358 = vmax.f32 %v2342, 0.0
        %v2359 = vmax.f32 %v2343, 0.0
        %v2360 = vmax.f32 %v2344, 0.0
        %v2361 = vmax.f32 %v2345, 0.0
        %v2362 = vmax.f32 %v2346, 0.0
        %v2363 = vmax.f32 %v2347, 0.0
        %v2364 = vmax.f32 %v2348, 0.0
        %v2365 = vmax.f32 %v2349, 0.0
        %v2366 = vmax.f32 %v2350, 0.0
        %v2367 = vmax.f32 %v2351, 0.0
        %v2368 = vmax.f32 %v2352, 0.0
        %v2369 = vmax.f32 %v2353, 0.0
        %v2370 = vmax.f32 %v2354, 0.0
        %v2371 = vmax.f32 %v2355, 0.0
        %vm2372 = vcmask 523264
        %2373 = vst.msk [vmem:[%s252] sm:$0xff] %vm2372, %v2356
        %2374 = vst.msk [vmem:[%s252 + $0x8] sm:$0xff] %vm2372, %v2357
        %2375 = vst.msk [vmem:[%s252 + $0x10] sm:$0xff] %vm2372, %v2358
        %2376 = vst.msk [vmem:[%s252 + $0x18] sm:$0xff] %vm2372, %v2359
        %2377 = vst.msk [vmem:[%s252 + $0x20] sm:$0xff] %vm2372, %v2360
        %2378 = vst.msk [vmem:[%s252 + $0x28] sm:$0xff] %vm2372, %v2361
        %2379 = vst.msk [vmem:[%s252 + $0x30] sm:$0xff] %vm2372, %v2362
        %2380 = vst.msk [vmem:[%s252 + $0x38] sm:$0xff] %vm2372, %v2363
        %2389 = vrot.lane.b32.xlu0 %v2364, 64
        %v2390 = vpop.permute.xlu0 %2389
        %2391 = vrot.lane.b32.xlu0 %v2365, 64
        %v2392 = vpop.permute.xlu0 %2391
        %2393 = vrot.lane.b32.xlu0 %v2366, 64
        %v2394 = vpop.permute.xlu0 %2393
        %2395 = vrot.lane.b32.xlu0 %v2367, 64
        %v2396 = vpop.permute.xlu0 %2395
        %2397 = vrot.lane.b32.xlu0 %v2368, 64
        %v2398 = vpop.permute.xlu0 %2397
        %2399 = vrot.lane.b32.xlu0 %v2369, 64
        %v2400 = vpop.permute.xlu0 %2399
        %2401 = vrot.lane.b32.xlu0 %v2370, 64
        %v2402 = vpop.permute.xlu0 %2401
        %2403 = vrot.lane.b32.xlu0 %v2371, 64
        %v2404 = vpop.permute.xlu0 %2403
        %vm2413 = vcmask 1048064
        %2414 = vst.msk [vmem:[%s252] sm:$0xff] %vm2413, %v2390
        %2415 = vst.msk [vmem:[%s252 + $0x8] sm:$0xff] %vm2413, %v2392
        %2416 = vst.msk [vmem:[%s252 + $0x10] sm:$0xff] %vm2413, %v2394
        %2417 = vst.msk [vmem:[%s252 + $0x18] sm:$0xff] %vm2413, %v2396
        %2418 = vst.msk [vmem:[%s252 + $0x20] sm:$0xff] %vm2413, %v2398
        %2419 = vst.msk [vmem:[%s252 + $0x28] sm:$0xff] %vm2413, %v2400
        %2420 = vst.msk [vmem:[%s252 + $0x30] sm:$0xff] %vm2413, %v2402
        %2421 = vst.msk [vmem:[%s252 + $0x38] sm:$0xff] %vm2413, %v2404
        %p2422 = scmp.lt.s32.totalorder %s21, 1
        %s2423 = scalar_select %p2422, %s21, 1
        %s2424 = smul.addr %s2423, 32
        %s2425 = smul.addr %s2424, 8
        %s2426 = scalar_lea.vmem %s5, %s2425
        %s2427 = sand.u32 %s165, 1
        %s2428 = scalar_lea.sflag [#allocation4], %s2427
        %s2429 = sand.u32 %s165, 1
        %s2430 = smul.addr %s2429, 64
        %s2431 = scalar_lea.vmem [#allocation3], %s2430
        // Predicated region
        $region41: #{siam_backbone_forward.1} parent=39 // pred_check
          %p2432 = pneg %p149
        $region42: #{siam_backbone_forward.1} parent=39 // pred_check_branch
          %2434 = sbr.rel (%p2432) target = $region44
        $region43: #{siam_backbone_forward.1} parent=39 // pred_region
          _
        $region44: #{siam_backbone_forward.1} parent=39 // pred_fallthru
          _
        // Predicated region
        $region45: #{siam_backbone_forward.1} parent=39 // pred_check
          %p2435 = pneg %p175
        $region46: #{siam_backbone_forward.1} parent=39 // pred_check_branch
          %2437 = sbr.rel (%p2435) target = $region48
        $region47: #{siam_backbone_forward.1} parent=39 // pred_region
          %2439 = vsyncadd %s2428, 0
          %s2440 = smul.addr %s21, 8
          %s2441 = smul.addr %s2440, 8
          %s2442 = scalar_lea.hbm %s6, %s2441
          %s2443 = sshll.u32 %s2431, 4
          %s2444 = int_to_ptr.vmem [resolvable:$true] %s2443
          %s2445 = sshll.u32 %s2442, 4
          %s2446 = int_to_ptr.hbm [resolvable:$true] %s2445
          %2451 = dma.vmem_to_hbm [thread:$0]  %s2444, 1024, %s2446, %s2428, 128, 128, 8
        $region48: #{siam_backbone_forward.1} parent=39 // pred_fallthru
          _
      $region40: #{siam_backbone_forward.1} parent=5 // pred_fallthru
        _
      %p2452 = scmp.le.s32.totalorder 2, %s16
      // Predicated region
      $region49: #{siam_backbone_forward.1} parent=5 // pred_check
        %p2453 = pneg %p2452
      $region50: #{siam_backbone_forward.1} parent=5 // pred_check_branch
        %2455 = sbr.rel (%p2453) target = $region52
      $region51: #{siam_backbone_forward.1} parent=5 // pred_region
        %s2456 = ssub.s32 %s16, 2
        // Predicated region
        $region53: #{siam_backbone_forward.1} parent=51 // pred_check
          %p2457 = pneg %p155
        $region54: #{siam_backbone_forward.1} parent=51 // pred_check_branch
          %2459 = sbr.rel (%p2457) target = $region56
        $region55: #{siam_backbone_forward.1} parent=51 // pred_region
          %p2460 = scmp.lt.s32.totalorder %s22, 1
          %s2461 = scalar_select %p2460, %s22, 1
          %s2462 = smul.addr %s2461, 32
          %s2463 = smul.addr %s2462, 8
          %s2464 = scalar_lea.vmem %s5, %s2463
        $region56: #{siam_backbone_forward.1} parent=51 // pred_fallthru
          _
        // Predicated region
        $region57: #{siam_backbone_forward.1} parent=51 // pred_check
          %p2465 = pneg %p181
        $region58: #{siam_backbone_forward.1} parent=51 // pred_check_branch
          %2467 = sbr.rel (%p2465) target = $region60
        $region59: #{siam_backbone_forward.1} parent=51 // pred_region
          %s2468 = sand.u32 %s166, 1
          %s2469 = scalar_lea.sflag [#allocation4], %s2468
          %s2470 = sand.u32 %s166, 1
          %s2471 = smul.addr %s2470, 64
          %s2472 = scalar_lea.vmem [#allocation3], %s2471
          %2474 = dma.done %s2469, 1024
        $region60: #{siam_backbone_forward.1} parent=51 // pred_fallthru
          _
      $region52: #{siam_backbone_forward.1} parent=5 // pred_fallthru
        _
    $region6: #{siam_backbone_forward.1} parent=1 // loop_footer
      %s20 = sadd.s32 1, %s16
    $region7: #{siam_backbone_forward.1} parent=1 // loop_footer_branch
      %15 = sbr.rel target = $region3
    $region8: #{siam_backbone_forward.1} parent=1 // loop_exit
      _
    %2475 = vsyncpa [#allocation4], 1
    %s2476 = scalar_lea.sflag [#allocation4], 1
    %2477 = vsyncpa %s2476, 1

</llo_original>
